<compile_context>
chip_gen: v5e
topology: v5e:2x2
jax: 0.10.0
libtpu: 0.0.40
codegen_flags: <defaults>
</compile_context>

<pallas_src>
import functools

import jax
import jax.numpy as jnp
from jax.experimental import pallas as pl
from jax.experimental.pallas import tpu as pltpu


# OGB-style molecular node feature dims (get_node_feature_dims()).
FULL_NODE_FEATURE_DIMS = [119, 4, 12, 12, 10, 6, 6, 2, 2]

V_PAD = 128  # sum(FULL_NODE_FEATURE_DIMS[1:]) = 54, padded to one lane-width.


def _node_encoder_kernel(xT_ref, embT_ref, oT_ref, *, offsets, num_features, chunk):
    # xT_ref:   [F, tile_n]        int32   (feature-major, node along lanes)
    # embT_ref: [emb_dim, V_pad]   float32 (transposed concatenated tables, resident)
    # oT_ref:   [emb_dim, tile_n]  float32 (transposed output, lane-dense stores)
    tile_n = xT_ref.shape[1]
    v_pad = embT_ref.shape[1]

    x = xT_ref[...]          # [F, tile_n] int32 (tiny load)
    embT = embT_ref[...]     # [emb_dim, V_pad] f32

    # Hoisted: column index along the sublane (vocab) axis, reused by every chunk.
    iota = jax.lax.broadcasted_iota(jnp.int32, (v_pad, chunk), 0)

    # Block the multihot+matmul by 128-wide lane chunks so the live f32
    # intermediate stays ~64 KiB and the MXU push of chunk c-1 overlaps the
    # compare/OR work of chunk c.
    for c in range(tile_n // chunk):
        lo = c * chunk
        x_chunk = x[:, lo:lo + chunk]                          # [F, chunk]
        # Build the multi-hot with boolean OR (offset ranges are disjoint, so OR
        # is exact) and a single cast to f32 at the end — ~1/3 of the VALU ops
        # of the compare+cast+add formulation.  Feature 0 is skipped on purpose.
        hit = None
        for i in range(1, num_features):
            shifted = x_chunk[i:i + 1, :] + offsets[i]          # [1, chunk]
            m = iota == shifted                                 # [v_pad, chunk] bool
            hit = m if hit is None else jnp.logical_or(hit, m)
        multihot = hit.astype(jnp.float32)                      # [v_pad, chunk]

        # out^T chunk = E^T @ multihot : MXU M=emb_dim, K=V_pad, N=chunk(=128).
        oT_ref[:, lo:lo + chunk] = jnp.dot(
            embT, multihot, preferred_element_type=jnp.float32)


def node_encoder_forward(x, emb_concat, *, offsets, tile_n=512, chunk=128):
    """x: [N, F] int32;  emb_concat: [V_pad, emb_dim] f32;  returns [N, emb_dim] f32."""
    n, f = x.shape
    v_pad, emb_dim = emb_concat.shape
    assert tile_n % chunk == 0 and chunk % 128 == 0

    # Pad N to a multiple of tile_n (padded rows use index 0, which is valid for
    # every table; their outputs are sliced off below).  Transpose to the
    # lane-dense [F, N_pad] layout — wrapper-side plumbing only.
    n_pad = pl.cdiv(n, tile_n) * tile_n
    xT = jnp.pad(x.astype(jnp.int32), ((0, n_pad - n), (0, 0))).T   # [F, n_pad]
    embT = emb_concat.T                                             # [emb_dim, v_pad]

    kernel = functools.partial(_node_encoder_kernel,
                               offsets=offsets, num_features=f, chunk=chunk)

    grid = (n_pad // tile_n,)
    cost = pl.CostEstimate(
        flops=2 * n_pad * v_pad * emb_dim,
        transcendentals=0,
        bytes_accessed=n_pad * f * 4 + v_pad * emb_dim * 4 + n_pad * emb_dim * 4,
    )

    outT = pl.pallas_call(
        kernel,
        out_shape=jax.ShapeDtypeStruct((emb_dim, n_pad), jnp.float32),
        grid_spec=pltpu.PrefetchScalarGridSpec(
            num_scalar_prefetch=0,
            grid=grid,
            in_specs=[
                pl.BlockSpec((f, tile_n), lambda i: (0, i)),        # x^T tile
                pl.BlockSpec((emb_dim, v_pad), lambda i: (0, 0)),   # resident table^T
            ],
            out_specs=pl.BlockSpec((emb_dim, tile_n), lambda i: (0, i)),
        ),
        compiler_params=pltpu.CompilerParams(
            dimension_semantics=("parallel",)),
        cost_estimate=cost,
    )(xT, embT)

    return outT[:, :n].T                                            # [N, emb_dim]


def make_embedding_tables(key, emb_dim):
    """Xavier-uniform init of one embedding table per feature dim (deterministic)."""
    tables = []
    for dim in FULL_NODE_FEATURE_DIMS:
        key, sub = jax.random.split(key)
        bound = (6.0 / (dim + emb_dim)) ** 0.5
        tables.append(jax.random.uniform(sub, (dim, emb_dim),
                                         minval=-bound, maxval=bound,
                                         dtype=jnp.float32))
    return tables


def build_concat_table(tables, v_pad=V_PAD):
    """Concatenate tables for features 1..F-1 with row offsets; pad rows to v_pad."""
    f = len(tables)
    offsets = [0] * f
    rows = []
    cur = 0
    for i in range(1, f):
        offsets[i] = cur
        rows.append(tables[i])
        cur += tables[i].shape[0]
    assert cur <= v_pad, "vocab sizes exceed V_pad; grow V_pad to next multiple of 128"
    concat = jnp.concatenate(rows, axis=0)
    concat = jnp.pad(concat, ((0, v_pad - cur), (0, 0)))
    return concat, tuple(offsets)


def reference_forward(x, tables):
    """Pure-JAX reference replicating the torch forward exactly (skips feature 0)."""
    out = 0
    for i in range(1, x.shape[1]):
        out = out + tables[i][x[:, i]]
    return out


if __name__ == "__main__":
    emb_dim = 32
    n_nodes = 1000          # deliberately NOT a multiple of tile_n; grid has 2 steps
    f = len(FULL_NODE_FEATURE_DIMS)

    key = jax.random.PRNGKey(0)
    tables = make_embedding_tables(key, emb_dim)
    emb_concat, offsets = build_concat_table(tables, v_pad=V_PAD)

    # Deterministic integer node features: column i in [0, dim_i).
    key_x = jax.random.PRNGKey(0)
    cols = []
    for dim in FULL_NODE_FEATURE_DIMS:
        key_x, sub = jax.random.split(key_x)
        cols.append(jax.random.randint(sub, (n_nodes, 1), 0, dim, dtype=jnp.int32))
    x = jnp.concatenate(cols, axis=1)           # [N, F] int32

    out = node_encoder_forward(x, emb_concat, offsets=offsets,
                               tile_n=512, chunk=128)
    out = jax.block_until_ready(out)

    ref = reference_forward(x, tables)
    assert out.shape == (n_nodes, emb_dim)
    assert jnp.allclose(out, ref, atol=1e-5, rtol=1e-5), "mismatch vs reference"

    print("KERNEL_OK")
</pallas_src>

<mosaic_0001>
module attributes {stable_mosaic.version = 11 : i64} {
  func.func @_node_encoder_kernel(%arg0: i32, %arg1: memref<9x512xi32, #tpu.memory_space<vmem>>, %arg2: memref<32x128xf32, #tpu.memory_space<vmem>>, %arg3: memref<32x512xf32, #tpu.memory_space<vmem>>) attributes {dimension_semantics = [#tpu.dimension_semantics<parallel>], iteration_bounds = array<i64: 2>, scalar_prefetch = 0 : i64, scratch_operands = 0 : i64, tpu.core_type = #tpu.core_type<tc>, window_params = [{transform_indices = @transform_0, window_bounds = array<i64: 9, 512>}, {pipeline_mode = #tpu.pipeline_mode<synchronous>, transform_indices = @transform_1, window_bounds = array<i64: 32, 128>}, {transform_indices = @transform_2, window_bounds = array<i64: 32, 512>}]} {
    %c0 = arith.constant 0 : index
    %c0_0 = arith.constant 0 : index
    %0 = vector.load %arg1[%c0, %c0_0] : memref<9x512xi32, #tpu.memory_space<vmem>>, vector<9x512xi32>
    %c0_1 = arith.constant 0 : index
    %c0_2 = arith.constant 0 : index
    %1 = vector.load %arg2[%c0_1, %c0_2] : memref<32x128xf32, #tpu.memory_space<vmem>>, vector<32x128xf32>
    %2 = tpu.iota {dimensions = array<i32: 0>} : vector<128x128xi32>
    %3 = vector.extract_strided_slice %0 {offsets = [0, 0], sizes = [9, 128], strides = [1, 1]} : vector<9x512xi32> to vector<9x128xi32>
    %4 = vector.extract_strided_slice %3 {offsets = [1, 0], sizes = [1, 128], strides = [1, 1]} : vector<9x128xi32> to vector<1x128xi32>
    %c0_i32 = arith.constant 0 : i32
    %5 = vector.broadcast %c0_i32 : i32 to vector<1x128xi32>
    %6 = arith.addi %4, %5 : vector<1x128xi32>
    %7 = vector.broadcast %6 : vector<1x128xi32> to vector<128x128xi32>
    %8 = arith.cmpi eq, %2, %7 : vector<128x128xi32>
    %9 = vector.extract_strided_slice %3 {offsets = [2, 0], sizes = [1, 128], strides = [1, 1]} : vector<9x128xi32> to vector<1x128xi32>
    %c4_i32 = arith.constant 4 : i32
    %10 = vector.broadcast %c4_i32 : i32 to vector<1x128xi32>
    %11 = arith.addi %9, %10 : vector<1x128xi32>
    %12 = vector.broadcast %11 : vector<1x128xi32> to vector<128x128xi32>
    %13 = arith.cmpi eq, %2, %12 : vector<128x128xi32>
    %14 = arith.ori %8, %13 : vector<128x128xi1>
    %15 = vector.extract_strided_slice %3 {offsets = [3, 0], sizes = [1, 128], strides = [1, 1]} : vector<9x128xi32> to vector<1x128xi32>
    %c16_i32 = arith.constant 16 : i32
    %16 = vector.broadcast %c16_i32 : i32 to vector<1x128xi32>
    %17 = arith.addi %15, %16 : vector<1x128xi32>
    %18 = vector.broadcast %17 : vector<1x128xi32> to vector<128x128xi32>
    %19 = arith.cmpi eq, %2, %18 : vector<128x128xi32>
    %20 = arith.ori %14, %19 : vector<128x128xi1>
    %21 = vector.extract_strided_slice %3 {offsets = [4, 0], sizes = [1, 128], strides = [1, 1]} : vector<9x128xi32> to vector<1x128xi32>
    %c28_i32 = arith.constant 28 : i32
    %22 = vector.broadcast %c28_i32 : i32 to vector<1x128xi32>
    %23 = arith.addi %21, %22 : vector<1x128xi32>
    %24 = vector.broadcast %23 : vector<1x128xi32> to vector<128x128xi32>
    %25 = arith.cmpi eq, %2, %24 : vector<128x128xi32>
    %26 = arith.ori %20, %25 : vector<128x128xi1>
    %27 = vector.extract_strided_slice %3 {offsets = [5, 0], sizes = [1, 128], strides = [1, 1]} : vector<9x128xi32> to vector<1x128xi32>
    %c38_i32 = arith.constant 38 : i32
    %28 = vector.broadcast %c38_i32 : i32 to vector<1x128xi32>
    %29 = arith.addi %27, %28 : vector<1x128xi32>
    %30 = vector.broadcast %29 : vector<1x128xi32> to vector<128x128xi32>
    %31 = arith.cmpi eq, %2, %30 : vector<128x128xi32>
    %32 = arith.ori %26, %31 : vector<128x128xi1>
    %33 = vector.extract_strided_slice %3 {offsets = [6, 0], sizes = [1, 128], strides = [1, 1]} : vector<9x128xi32> to vector<1x128xi32>
    %c44_i32 = arith.constant 44 : i32
    %34 = vector.broadcast %c44_i32 : i32 to vector<1x128xi32>
    %35 = arith.addi %33, %34 : vector<1x128xi32>
    %36 = vector.broadcast %35 : vector<1x128xi32> to vector<128x128xi32>
    %37 = arith.cmpi eq, %2, %36 : vector<128x128xi32>
    %38 = arith.ori %32, %37 : vector<128x128xi1>
    %39 = vector.extract_strided_slice %3 {offsets = [7, 0], sizes = [1, 128], strides = [1, 1]} : vector<9x128xi32> to vector<1x128xi32>
    %c50_i32 = arith.constant 50 : i32
    %40 = vector.broadcast %c50_i32 : i32 to vector<1x128xi32>
    %41 = arith.addi %39, %40 : vector<1x128xi32>
    %42 = vector.broadcast %41 : vector<1x128xi32> to vector<128x128xi32>
    %43 = arith.cmpi eq, %2, %42 : vector<128x128xi32>
    %44 = arith.ori %38, %43 : vector<128x128xi1>
    %45 = vector.extract_strided_slice %3 {offsets = [8, 0], sizes = [1, 128], strides = [1, 1]} : vector<9x128xi32> to vector<1x128xi32>
    %c52_i32 = arith.constant 52 : i32
    %46 = vector.broadcast %c52_i32 : i32 to vector<1x128xi32>
    %47 = arith.addi %45, %46 : vector<1x128xi32>
    %48 = vector.broadcast %47 : vector<1x128xi32> to vector<128x128xi32>
    %49 = arith.cmpi eq, %2, %48 : vector<128x128xi32>
    %50 = arith.ori %44, %49 : vector<128x128xi1>
    %51 = arith.extui %50 : vector<128x128xi1> to vector<128x128xi32>
    %52 = arith.sitofp %51 : vector<128x128xi32> to vector<128x128xf32>
    %cst = arith.constant dense<0.000000e+00> : vector<32x128xf32>
    %53 = tpu.matmul %1, %52, %cst {dimension_numbers = #tpu.dot_dimension_numbers<[1], [0], [0], [1], [0, 0, 1, 1], [], []>} : vector<32x128xf32>, vector<128x128xf32>, vector<32x128xf32> -> vector<32x128xf32>
    %c0_3 = arith.constant 0 : index
    %c0_4 = arith.constant 0 : index
    %54 = vector.load %arg3[%c0_3, %c0_4] : memref<32x512xf32, #tpu.memory_space<vmem>>, vector<32x128xf32>
    tpu.vector_store %arg3[%c0_3, %c0_4], %53 {strides = array<i32>} : memref<32x512xf32, #tpu.memory_space<vmem>>, vector<32x128xf32>,
    %55 = vector.extract_strided_slice %0 {offsets = [0, 128], sizes = [9, 128], strides = [1, 1]} : vector<9x512xi32> to vector<9x128xi32>
    %56 = vector.extract_strided_slice %55 {offsets = [1, 0], sizes = [1, 128], strides = [1, 1]} : vector<9x128xi32> to vector<1x128xi32>
    %c0_i32_5 = arith.constant 0 : i32
    %57 = vector.broadcast %c0_i32_5 : i32 to vector<1x128xi32>
    %58 = arith.addi %56, %57 : vector<1x128xi32>
    %59 = vector.broadcast %58 : vector<1x128xi32> to vector<128x128xi32>
    %60 = arith.cmpi eq, %2, %59 : vector<128x128xi32>
    %61 = vector.extract_strided_slice %55 {offsets = [2, 0], sizes = [1, 128], strides = [1, 1]} : vector<9x128xi32> to vector<1x128xi32>
    %c4_i32_6 = arith.constant 4 : i32
    %62 = vector.broadcast %c4_i32_6 : i32 to vector<1x128xi32>
    %63 = arith.addi %61, %62 : vector<1x128xi32>
    %64 = vector.broadcast %63 : vector<1x128xi32> to vector<128x128xi32>
    %65 = arith.cmpi eq, %2, %64 : vector<128x128xi32>
    %66 = arith.ori %60, %65 : vector<128x128xi1>
    %67 = vector.extract_strided_slice %55 {offsets = [3, 0], sizes = [1, 128], strides = [1, 1]} : vector<9x128xi32> to vector<1x128xi32>
    %c16_i32_7 = arith.constant 16 : i32
    %68 = vector.broadcast %c16_i32_7 : i32 to vector<1x128xi32>
    %69 = arith.addi %67, %68 : vector<1x128xi32>
    %70 = vector.broadcast %69 : vector<1x128xi32> to vector<128x128xi32>
    %71 = arith.cmpi eq, %2, %70 : vector<128x128xi32>
    %72 = arith.ori %66, %71 : vector<128x128xi1>
    %73 = vector.extract_strided_slice %55 {offsets = [4, 0], sizes = [1, 128], strides = [1, 1]} : vector<9x128xi32> to vector<1x128xi32>
    %c28_i32_8 = arith.constant 28 : i32
    %74 = vector.broadcast %c28_i32_8 : i32 to vector<1x128xi32>
    %75 = arith.addi %73, %74 : vector<1x128xi32>
    %76 = vector.broadcast %75 : vector<1x128xi32> to vector<128x128xi32>
    %77 = arith.cmpi eq, %2, %76 : vector<128x128xi32>
    %78 = arith.ori %72, %77 : vector<128x128xi1>
    %79 = vector.extract_strided_slice %55 {offsets = [5, 0], sizes = [1, 128], strides = [1, 1]} : vector<9x128xi32> to vector<1x128xi32>
    %c38_i32_9 = arith.constant 38 : i32
    %80 = vector.broadcast %c38_i32_9 : i32 to vector<1x128xi32>
    %81 = arith.addi %79, %80 : vector<1x128xi32>
    %82 = vector.broadcast %81 : vector<1x128xi32> to vector<128x128xi32>
    %83 = arith.cmpi eq, %2, %82 : vector<128x128xi32>
    %84 = arith.ori %78, %83 : vector<128x128xi1>
    %85 = vector.extract_strided_slice %55 {offsets = [6, 0], sizes = [1, 128], strides = [1, 1]} : vector<9x128xi32> to vector<1x128xi32>
    %c44_i32_10 = arith.constant 44 : i32
    %86 = vector.broadcast %c44_i32_10 : i32 to vector<1x128xi32>
    %87 = arith.addi %85, %86 : vector<1x128xi32>
    %88 = vector.broadcast %87 : vector<1x128xi32> to vector<128x128xi32>
    %89 = arith.cmpi eq, %2, %88 : vector<128x128xi32>
    %90 = arith.ori %84, %89 : vector<128x128xi1>
    %91 = vector.extract_strided_slice %55 {offsets = [7, 0], sizes = [1, 128], strides = [1, 1]} : vector<9x128xi32> to vector<1x128xi32>
    %c50_i32_11 = arith.constant 50 : i32
    %92 = vector.broadcast %c50_i32_11 : i32 to vector<1x128xi32>
    %93 = arith.addi %91, %92 : vector<1x128xi32>
    %94 = vector.broadcast %93 : vector<1x128xi32> to vector<128x128xi32>
    %95 = arith.cmpi eq, %2, %94 : vector<128x128xi32>
    %96 = arith.ori %90, %95 : vector<128x128xi1>
    %97 = vector.extract_strided_slice %55 {offsets = [8, 0], sizes = [1, 128], strides = [1, 1]} : vector<9x128xi32> to vector<1x128xi32>
    %c52_i32_12 = arith.constant 52 : i32
    %98 = vector.broadcast %c52_i32_12 : i32 to vector<1x128xi32>
    %99 = arith.addi %97, %98 : vector<1x128xi32>
    %100 = vector.broadcast %99 : vector<1x128xi32> to vector<128x128xi32>
    %101 = arith.cmpi eq, %2, %100 : vector<128x128xi32>
    %102 = arith.ori %96, %101 : vector<128x128xi1>
    %103 = arith.extui %102 : vector<128x128xi1> to vector<128x128xi32>
    %104 = arith.sitofp %103 : vector<128x128xi32> to vector<128x128xf32>
    %cst_13 = arith.constant dense<0.000000e+00> : vector<32x128xf32>
    %105 = tpu.matmul %1, %104, %cst_13 {dimension_numbers = #tpu.dot_dimension_numbers<[1], [0], [0], [1], [0, 0, 1, 1], [], []>} : vector<32x128xf32>, vector<128x128xf32>, vector<32x128xf32> -> vector<32x128xf32>
    %c0_14 = arith.constant 0 : index
    %c128 = arith.constant 128 : index
    %106 = vector.load %arg3[%c0_14, %c128] : memref<32x512xf32, #tpu.memory_space<vmem>>, vector<32x128xf32>
    tpu.vector_store %arg3[%c0_14, %c128], %105 {strides = array<i32>} : memref<32x512xf32, #tpu.memory_space<vmem>>, vector<32x128xf32>,
    %107 = vector.extract_strided_slice %0 {offsets = [0, 256], sizes = [9, 128], strides = [1, 1]} : vector<9x512xi32> to vector<9x128xi32>
    %108 = vector.extract_strided_slice %107 {offsets = [1, 0], sizes = [1, 128], strides = [1, 1]} : vector<9x128xi32> to vector<1x128xi32>
    %c0_i32_15 = arith.constant 0 : i32
    %109 = vector.broadcast %c0_i32_15 : i32 to vector<1x128xi32>
    %110 = arith.addi %108, %109 : vector<1x128xi32>
    %111 = vector.broadcast %110 : vector<1x128xi32> to vector<128x128xi32>
    %112 = arith.cmpi eq, %2, %111 : vector<128x128xi32>
    %113 = vector.extract_strided_slice %107 {offsets = [2, 0], sizes = [1, 128], strides = [1, 1]} : vector<9x128xi32> to vector<1x128xi32>
    %c4_i32_16 = arith.constant 4 : i32
    %114 = vector.broadcast %c4_i32_16 : i32 to vector<1x128xi32>
    %115 = arith.addi %113, %114 : vector<1x128xi32>
    %116 = vector.broadcast %115 : vector<1x128xi32> to vector<128x128xi32>
    %117 = arith.cmpi eq, %2, %116 : vector<128x128xi32>
    %118 = arith.ori %112, %117 : vector<128x128xi1>
    %119 = vector.extract_strided_slice %107 {offsets = [3, 0], sizes = [1, 128], strides = [1, 1]} : vector<9x128xi32> to vector<1x128xi32>
    %c16_i32_17 = arith.constant 16 : i32
    %120 = vector.broadcast %c16_i32_17 : i32 to vector<1x128xi32>
    %121 = arith.addi %119, %120 : vector<1x128xi32>
    %122 = vector.broadcast %121 : vector<1x128xi32> to vector<128x128xi32>
    %123 = arith.cmpi eq, %2, %122 : vector<128x128xi32>
    %124 = arith.ori %118, %123 : vector<128x128xi1>
    %125 = vector.extract_strided_slice %107 {offsets = [4, 0], sizes = [1, 128], strides = [1, 1]} : vector<9x128xi32> to vector<1x128xi32>
    %c28_i32_18 = arith.constant 28 : i32
    %126 = vector.broadcast %c28_i32_18 : i32 to vector<1x128xi32>
    %127 = arith.addi %125, %126 : vector<1x128xi32>
    %128 = vector.broadcast %127 : vector<1x128xi32> to vector<128x128xi32>
    %129 = arith.cmpi eq, %2, %128 : vector<128x128xi32>
    %130 = arith.ori %124, %129 : vector<128x128xi1>
    %131 = vector.extract_strided_slice %107 {offsets = [5, 0], sizes = [1, 128], strides = [1, 1]} : vector<9x128xi32> to vector<1x128xi32>
    %c38_i32_19 = arith.constant 38 : i32
    %132 = vector.broadcast %c38_i32_19 : i32 to vector<1x128xi32>
    %133 = arith.addi %131, %132 : vector<1x128xi32>
    %134 = vector.broadcast %133 : vector<1x128xi32> to vector<128x128xi32>
    %135 = arith.cmpi eq, %2, %134 : vector<128x128xi32>
    %136 = arith.ori %130, %135 : vector<128x128xi1>
    %137 = vector.extract_strided_slice %107 {offsets = [6, 0], sizes = [1, 128], strides = [1, 1]} : vector<9x128xi32> to vector<1x128xi32>
    %c44_i32_20 = arith.constant 44 : i32
    %138 = vector.broadcast %c44_i32_20 : i32 to vector<1x128xi32>
    %139 = arith.addi %137, %138 : vector<1x128xi32>
    %140 = vector.broadcast %139 : vector<1x128xi32> to vector<128x128xi32>
    %141 = arith.cmpi eq, %2, %140 : vector<128x128xi32>
    %142 = arith.ori %136, %141 : vector<128x128xi1>
    %143 = vector.extract_strided_slice %107 {offsets = [7, 0], sizes = [1, 128], strides = [1, 1]} : vector<9x128xi32> to vector<1x128xi32>
    %c50_i32_21 = arith.constant 50 : i32
    %144 = vector.broadcast %c50_i32_21 : i32 to vector<1x128xi32>
    %145 = arith.addi %143, %144 : vector<1x128xi32>
    %146 = vector.broadcast %145 : vector<1x128xi32> to vector<128x128xi32>
    %147 = arith.cmpi eq, %2, %146 : vector<128x128xi32>
    %148 = arith.ori %142, %147 : vector<128x128xi1>
    %149 = vector.extract_strided_slice %107 {offsets = [8, 0], sizes = [1, 128], strides = [1, 1]} : vector<9x128xi32> to vector<1x128xi32>
    %c52_i32_22 = arith.constant 52 : i32
    %150 = vector.broadcast %c52_i32_22 : i32 to vector<1x128xi32>
    %151 = arith.addi %149, %150 : vector<1x128xi32>
    %152 = vector.broadcast %151 : vector<1x128xi32> to vector<128x128xi32>
    %153 = arith.cmpi eq, %2, %152 : vector<128x128xi32>
    %154 = arith.ori %148, %153 : vector<128x128xi1>
    %155 = arith.extui %154 : vector<128x128xi1> to vector<128x128xi32>
    %156 = arith.sitofp %155 : vector<128x128xi32> to vector<128x128xf32>
    %cst_23 = arith.constant dense<0.000000e+00> : vector<32x128xf32>
    %157 = tpu.matmul %1, %156, %cst_23 {dimension_numbers = #tpu.dot_dimension_numbers<[1], [0], [0], [1], [0, 0, 1, 1], [], []>} : vector<32x128xf32>, vector<128x128xf32>, vector<32x128xf32> -> vector<32x128xf32>
    %c0_24 = arith.constant 0 : index
    %c256 = arith.constant 256 : index
    %158 = vector.load %arg3[%c0_24, %c256] : memref<32x512xf32, #tpu.memory_space<vmem>>, vector<32x128xf32>
    tpu.vector_store %arg3[%c0_24, %c256], %157 {strides = array<i32>} : memref<32x512xf32, #tpu.memory_space<vmem>>, vector<32x128xf32>,
    %159 = vector.extract_strided_slice %0 {offsets = [0, 384], sizes = [9, 128], strides = [1, 1]} : vector<9x512xi32> to vector<9x128xi32>
    %160 = vector.extract_strided_slice %159 {offsets = [1, 0], sizes = [1, 128], strides = [1, 1]} : vector<9x128xi32> to vector<1x128xi32>
    %c0_i32_25 = arith.constant 0 : i32
    %161 = vector.broadcast %c0_i32_25 : i32 to vector<1x128xi32>
    %162 = arith.addi %160, %161 : vector<1x128xi32>
    %163 = vector.broadcast %162 : vector<1x128xi32> to vector<128x128xi32>
    %164 = arith.cmpi eq, %2, %163 : vector<128x128xi32>
    %165 = vector.extract_strided_slice %159 {offsets = [2, 0], sizes = [1, 128], strides = [1, 1]} : vector<9x128xi32> to vector<1x128xi32>
    %c4_i32_26 = arith.constant 4 : i32
    %166 = vector.broadcast %c4_i32_26 : i32 to vector<1x128xi32>
    %167 = arith.addi %165, %166 : vector<1x128xi32>
    %168 = vector.broadcast %167 : vector<1x128xi32> to vector<128x128xi32>
    %169 = arith.cmpi eq, %2, %168 : vector<128x128xi32>
    %170 = arith.ori %164, %169 : vector<128x128xi1>
    %171 = vector.extract_strided_slice %159 {offsets = [3, 0], sizes = [1, 128], strides = [1, 1]} : vector<9x128xi32> to vector<1x128xi32>
    %c16_i32_27 = arith.constant 16 : i32
    %172 = vector.broadcast %c16_i32_27 : i32 to vector<1x128xi32>
    %173 = arith.addi %171, %172 : vector<1x128xi32>
    %174 = vector.broadcast %173 : vector<1x128xi32> to vector<128x128xi32>
    %175 = arith.cmpi eq, %2, %174 : vector<128x128xi32>
    %176 = arith.ori %170, %175 : vector<128x128xi1>
    %177 = vector.extract_strided_slice %159 {offsets = [4, 0], sizes = [1, 128], strides = [1, 1]} : vector<9x128xi32> to vector<1x128xi32>
    %c28_i32_28 = arith.constant 28 : i32
    %178 = vector.broadcast %c28_i32_28 : i32 to vector<1x128xi32>
    %179 = arith.addi %177, %178 : vector<1x128xi32>
    %180 = vector.broadcast %179 : vector<1x128xi32> to vector<128x128xi32>
    %181 = arith.cmpi eq, %2, %180 : vector<128x128xi32>
    %182 = arith.ori %176, %181 : vector<128x128xi1>
    %183 = vector.extract_strided_slice %159 {offsets = [5, 0], sizes = [1, 128], strides = [1, 1]} : vector<9x128xi32> to vector<1x128xi32>
    %c38_i32_29 = arith.constant 38 : i32
    %184 = vector.broadcast %c38_i32_29 : i32 to vector<1x128xi32>
    %185 = arith.addi %183, %184 : vector<1x128xi32>
    %186 = vector.broadcast %185 : vector<1x128xi32> to vector<128x128xi32>
    %187 = arith.cmpi eq, %2, %186 : vector<128x128xi32>
    %188 = arith.ori %182, %187 : vector<128x128xi1>
    %189 = vector.extract_strided_slice %159 {offsets = [6, 0], sizes = [1, 128], strides = [1, 1]} : vector<9x128xi32> to vector<1x128xi32>
    %c44_i32_30 = arith.constant 44 : i32
    %190 = vector.broadcast %c44_i32_30 : i32 to vector<1x128xi32>
    %191 = arith.addi %189, %190 : vector<1x128xi32>
    %192 = vector.broadcast %191 : vector<1x128xi32> to vector<128x128xi32>
    %193 = arith.cmpi eq, %2, %192 : vector<128x128xi32>
    %194 = arith.ori %188, %193 : vector<128x128xi1>
    %195 = vector.extract_strided_slice %159 {offsets = [7, 0], sizes = [1, 128], strides = [1, 1]} : vector<9x128xi32> to vector<1x128xi32>
    %c50_i32_31 = arith.constant 50 : i32
    %196 = vector.broadcast %c50_i32_31 : i32 to vector<1x128xi32>
    %197 = arith.addi %195, %196 : vector<1x128xi32>
    %198 = vector.broadcast %197 : vector<1x128xi32> to vector<128x128xi32>
    %199 = arith.cmpi eq, %2, %198 : vector<128x128xi32>
    %200 = arith.ori %194, %199 : vector<128x128xi1>
    %201 = vector.extract_strided_slice %159 {offsets = [8, 0], sizes = [1, 128], strides = [1, 1]} : vector<9x128xi32> to vector<1x128xi32>
    %c52_i32_32 = arith.constant 52 : i32
    %202 = vector.broadcast %c52_i32_32 : i32 to vector<1x128xi32>
    %203 = arith.addi %201, %202 : vector<1x128xi32>
    %204 = vector.broadcast %203 : vector<1x128xi32> to vector<128x128xi32>
    %205 = arith.cmpi eq, %2, %204 : vector<128x128xi32>
    %206 = arith.ori %200, %205 : vector<128x128xi1>
    %207 = arith.extui %206 : vector<128x128xi1> to vector<128x128xi32>
    %208 = arith.sitofp %207 : vector<128x128xi32> to vector<128x128xf32>
    %cst_33 = arith.constant dense<0.000000e+00> : vector<32x128xf32>
    %209 = tpu.matmul %1, %208, %cst_33 {dimension_numbers = #tpu.dot_dimension_numbers<[1], [0], [0], [1], [0, 0, 1, 1], [], []>} : vector<32x128xf32>, vector<128x128xf32>, vector<32x128xf32> -> vector<32x128xf32>
    %c0_34 = arith.constant 0 : index
    %c384 = arith.constant 384 : index
    %210 = vector.load %arg3[%c0_34, %c384] : memref<32x512xf32, #tpu.memory_space<vmem>>, vector<32x128xf32>
    tpu.vector_store %arg3[%c0_34, %c384], %209 {strides = array<i32>} : memref<32x512xf32, #tpu.memory_space<vmem>>, vector<32x128xf32>,
    return
  }
  func.func @transform_0(%arg0: i32) -> (i32, i32) {
    %c0_i32 = arith.constant 0 : i32
    %c0_i32_0 = arith.constant 0 : i32
    return %c0_i32, %arg0 : i32, i32
  }
  func.func @transform_1(%arg0: i32) -> (i32, i32) {
    %c0_i32 = arith.constant 0 : i32
    %c0_i32_0 = arith.constant 0 : i32
    %c0_i32_1 = arith.constant 0 : i32
    return %c0_i32, %c0_i32_0 : i32, i32
  }
  func.func @transform_2(%arg0: i32) -> (i32, i32) {
    %c0_i32 = arith.constant 0 : i32
    %c0_i32_0 = arith.constant 0 : i32
    return %c0_i32, %arg0 : i32, i32
  }
}

</mosaic_0001>

<llo_original>
// kernel: tpu_custom_call.1
$region0: #{tpu_custom_call.1}
  #allocation0 [shape = 'u32[]', space=smem, size = 0x4, offset = 0x4, fixed_abs, tag = 'smem constant byte address 0x4 - core index']
  #allocation1 [shape = 'u32[72,128]{1,0:T(1,128)}', space=vmem, size = 0x9000, scoped, tag = 'internal scratch']
  %s0 = inlined_call_operand.hbm [shape: s32[9,1024], index: 0, kind: input, shape index: {}]
  %s1 = inlined_call_operand.hbm [shape: f32[32,128], index: 1, kind: input, shape index: {}]
  %s2 = inlined_call_operand.hbm [shape: f32[32,1024], index: 2, kind: output, shape index: {}]
  %s3 = sld [smem:[#allocation0]]
  $region49: #{tpu_custom_call.1} parent=0
    _
  %s5 = ssub.s32 1, %s3
  %s6 = scalar_select 0, %s5, %s3
  $region1: #{tpu_custom_call.1} parent=0
    #allocation2 [shape = 'u8[65536]{0}', space=vmem, size = 0x10000, scoped, tag = 'input window, operand 0']
    #allocation3 [shape = 's32[2]{0}', space=sflag, size = 0x8, scoped, tag = 'scoped memory for tpu_custom_call.1']
    #allocation4 [shape = 's32[2]{0}', space=sflag, size = 0x8, scoped, tag = 'scoped memory for tpu_custom_call.1']
    #allocation5 [shape = 'u8[16384]{0}', space=vmem, size = 0x4000, scoped, tag = 'input window, operand 1, single buffered']
    #allocation6 [shape = 's32[1]{0}', space=sflag, size = 0x4, scoped, tag = 'scoped memory for tpu_custom_call.1']
    #allocation7 [shape = 'u8[131072]{0}', space=vmem, size = 0x20000, scoped, tag = 'output window, operand 0']
    %7 = vsyncpa [#allocation3], 0
    %s8 = scalar_lea.sflag [#allocation3], 1
    %9 = vsyncpa %s8, 0
    %10 = vsyncpa [#allocation6], 0
    %11 = vsyncpa [#allocation4], 0
    %s12 = scalar_lea.sflag [#allocation4], 1
    %13 = vsyncpa %s12, 0
    loop: start=0, step=1, limit=4
    $region2: #{tpu_custom_call.1} parent=1 // loop_pre_header
      _
    $region3: #{tpu_custom_call.1} parent=1 // loop_header
      %s15 = sphi 0, %s19
      %p16 = scmp.ge.s32.totalorder %s15, 4
      %s25 = sphi 0, %s27
      %s28 = sphi 0, %s25
      %s29 = sphi 0, %s28
      %s45 = sphi 0, %s29
      %s49 = sphi 0, %s49
      %s51 = sphi 0, %s49
      %s52 = sphi 0, %s51
      %s66 = sphi 0, %s52
      %s72 = sphi 0, %s74
      %s75 = sphi 0, %s72
      %s76 = sphi 0, %s75
      %s92 = sphi 0, %s76
    $region4: #{tpu_custom_call.1} parent=1 // loop_header_branch
      %18 = sbr.rel (%p16) target = $region8
    $region5: #{tpu_custom_call.1} parent=1 // loop_body
      %s20 = ssub.s32 %s15, 1
      %s21 = ssub.s32 %s15, 2
      %s22 = sadd.s32 %s15, 1
      %s23 = ssub.s32 %s15, %s22
      %p24 = scmp.eq.s32.totalorder %s23, 0
      %s26 = sadd.s32 %s25, 1
      %s27 = scalar_select %p24, %s25, %s26
      %p30 = pneg %p24
      %p31 = scmp.eq.s32.totalorder %s15, 1
      %p32 = por %p30, %p31
      %p33 = scmp.ne.s32.totalorder %s25, %s28
      %p34 = scmp.eq.s32.totalorder %s15, 0
      %p35 = por %p33, %p34
      %p36 = scmp.ne.s32.totalorder %s25, %s28
      %p37 = scmp.eq.s32.totalorder %s20, 1
      %p38 = por %p36, %p37
      %p39 = scmp.ne.s32.totalorder %s28, %s29
      %p40 = scmp.eq.s32.totalorder %s20, 0
      %p41 = por %p39, %p40
      %p42 = scmp.ne.s32.totalorder %s28, %s29
      %p43 = scmp.eq.s32.totalorder %s21, 1
      %p44 = por %p42, %p43
      %p46 = scmp.ne.s32.totalorder %s29, %s45
      %p47 = scmp.eq.s32.totalorder %s21, 0
      %p48 = por %p46, %p47
      %s50 = sadd.s32 %s49, 1
      %p53 = scmp.eq.s32.totalorder %s15, 1
      %p54 = scmp.ne.s32.totalorder %s49, %s51
      %p55 = scmp.eq.s32.totalorder %s15, 0
      %p56 = por %p54, %p55
      %p57 = scmp.ne.s32.totalorder %s49, %s51
      %p58 = scmp.eq.s32.totalorder %s20, 1
      %p59 = por %p57, %p58
      %p60 = scmp.ne.s32.totalorder %s51, %s52
      %p61 = scmp.eq.s32.totalorder %s20, 0
      %p62 = por %p60, %p61
      %p63 = scmp.ne.s32.totalorder %s51, %s52
      %p64 = scmp.eq.s32.totalorder %s21, 1
      %p65 = por %p63, %p64
      %p67 = scmp.ne.s32.totalorder %s52, %s66
      %p68 = scmp.eq.s32.totalorder %s21, 0
      %p69 = por %p67, %p68
      %s70 = ssub.s32 %s15, %s22
      %p71 = scmp.eq.s32.totalorder %s70, 0
      %s73 = sadd.s32 %s72, 1
      %s74 = scalar_select %p71, %s72, %s73
      %p77 = pneg %p71
      %p78 = scmp.eq.s32.totalorder %s15, 1
      %p79 = por %p77, %p78
      %p80 = scmp.ne.s32.totalorder %s72, %s75
      %p81 = scmp.eq.s32.totalorder %s15, 0
      %p82 = por %p80, %p81
      %p83 = scmp.ne.s32.totalorder %s72, %s75
      %p84 = scmp.eq.s32.totalorder %s20, 1
      %p85 = por %p83, %p84
      %p86 = scmp.ne.s32.totalorder %s75, %s76
      %p87 = scmp.eq.s32.totalorder %s20, 0
      %p88 = por %p86, %p87
      %p89 = scmp.ne.s32.totalorder %s75, %s76
      %p90 = scmp.eq.s32.totalorder %s21, 1
      %p91 = por %p89, %p90
      %p93 = scmp.ne.s32.totalorder %s76, %s92
      %p94 = scmp.eq.s32.totalorder %s21, 0
      %p95 = por %p93, %p94
      %p96 = scmp.le.s32.totalorder 1, %s15
      %p97 = scmp.lt.s32.totalorder %s15, 3
      %p98 = pnand %p96, %p97
      %p99 = pneg %p98
      // Predicated region
      $region9: #{tpu_custom_call.1} parent=5 // pred_check
        _
      $region10: #{tpu_custom_call.1} parent=5 // pred_check_branch
        %101 = sbr.rel (%p98) target = $region12
      $region11: #{tpu_custom_call.1} parent=5 // pred_region
        %s102 = ssub.s32 %s15, 1
        // Predicated region
        $region13: #{tpu_custom_call.1} parent=11 // pred_check
          %p103 = pneg %p62
        $region14: #{tpu_custom_call.1} parent=11 // pred_check_branch
          %105 = sbr.rel (%p103) target = $region16
        $region15: #{tpu_custom_call.1} parent=11 // pred_region
          %107 = vsyncadd [#allocation6], 0
          %s108 = sshll.u32 %s1, 4
          %s109 = int_to_ptr.hbm [resolvable:$true] %s108
          %s110 = sshll.u32 [#allocation5], 4
          %s111 = int_to_ptr.vmem [resolvable:$true] %s110
          %116 = dma.hbm_to_vmem [thread:$0]  %s109, 512, %s111, [#allocation6], 128, 128, 8
        $region16: #{tpu_custom_call.1} parent=11 // pred_fallthru
          _
      $region12: #{tpu_custom_call.1} parent=5 // pred_fallthru
        _
      %p117 = scmp.lt.s32.totalorder %s15, 2
      // Predicated region
      $region17: #{tpu_custom_call.1} parent=5 // pred_check
        %p118 = pneg %p117
      $region18: #{tpu_custom_call.1} parent=5 // pred_check_branch
        %120 = sbr.rel (%p118) target = $region20
      $region19: #{tpu_custom_call.1} parent=5 // pred_region
        // Predicated region
        $region21: #{tpu_custom_call.1} parent=19 // pred_check
          %p121 = pneg %p35
        $region22: #{tpu_custom_call.1} parent=19 // pred_check_branch
          %123 = sbr.rel (%p121) target = $region24
        $region23: #{tpu_custom_call.1} parent=19 // pred_region
          %s124 = sand.u32 %s25, 1
          %s125 = scalar_lea.sflag [#allocation3], %s124
          %s126 = sand.u32 %s25, 1
          %s127 = smul.addr %s126, 64
          %s128 = scalar_lea.vmem [#allocation2], %s127
          %s129 = smul.u32 4, %s15
          %131 = vsyncadd %s125, 0
          %s132 = smul.addr %s129, 8
          %s133 = scalar_lea.hbm %s0, %s132
          %s134 = sshll.u32 %s133, 4
          %s135 = int_to_ptr.hbm [resolvable:$true] %s134
          %s136 = sshll.u32 %s128, 4
          %s137 = int_to_ptr.vmem [resolvable:$true] %s136
          %142 = dma.hbm_to_vmem [thread:$0]  %s135, 1024, %s137, %s125, 1024, 512, 32
        $region24: #{tpu_custom_call.1} parent=19 // pred_fallthru
          _
      $region20: #{tpu_custom_call.1} parent=5 // pred_fallthru
        _
      %p143 = scmp.le.s32.totalorder 1, %s15
      %p144 = scmp.lt.s32.totalorder %s15, 3
      %p145 = pnand %p143, %p144
      %p146 = pneg %p145
      // Predicated region
      $region25: #{tpu_custom_call.1} parent=5 // pred_check
        _
      $region26: #{tpu_custom_call.1} parent=5 // pred_check_branch
        %148 = sbr.rel (%p145) target = $region28
      $region27: #{tpu_custom_call.1} parent=5 // pred_region
        %s149 = ssub.s32 %s15, 1
        %s150 = sand.u32 %s28, 1
        %s151 = scalar_lea.sflag [#allocation3], %s150
        %s152 = sand.u32 %s28, 1
        %s153 = smul.addr %s152, 64
        %s154 = scalar_lea.vmem [#allocation2], %s153
        // Predicated region
        $region29: #{tpu_custom_call.1} parent=27 // pred_check
          %p155 = pneg %p41
        $region30: #{tpu_custom_call.1} parent=27 // pred_check_branch
          %157 = sbr.rel (%p155) target = $region32
        $region31: #{tpu_custom_call.1} parent=27 // pred_region
          %159 = dma.done %s151, 1024
        $region32: #{tpu_custom_call.1} parent=27 // pred_fallthru
          _
        // Predicated region
        $region33: #{tpu_custom_call.1} parent=27 // pred_check
          %p160 = pneg %p62
        $region34: #{tpu_custom_call.1} parent=27 // pred_check_branch
          %162 = sbr.rel (%p160) target = $region36
        $region35: #{tpu_custom_call.1} parent=27 // pred_region
          %164 = dma.done [#allocation6], 512
        $region36: #{tpu_custom_call.1} parent=27 // pred_fallthru
          _
        %s165 = sand.u32 %s28, 1
        %s166 = scalar_lea.sflag [#allocation3], %s165
        %s167 = sand.u32 %s28, 1
        %s168 = smul.addr %s167, 64
        %s169 = scalar_lea.vmem [#allocation2], %s168
        %p170 = pneg %p41
        %p171 = pneg %p38
        %p172 = pneg %p62
        %p173 = pneg %p59
        %p174 = pneg %p88
        %p175 = pneg %p85
        %s176 = sand.u32 %s75, 1
        %s177 = scalar_lea.sflag [#allocation4], %s176
        %s178 = sand.u32 %s75, 1
        %s179 = smul.addr %s178, 128
        %s180 = scalar_lea.vmem [#allocation7], %s179
        %s181 = smul.u32 4, %s20
        %s182 = smul.u32 4, %s20
        %v183 = vld [vmem:[%s154] sm:$0xff]
        %v184 = vld [vmem:[%s154 + $0x8] sm:$0xff]
        %v185 = vld [vmem:[%s154 + $0x10] sm:$0xff]
        %v186 = vld [vmem:[%s154 + $0x18] sm:$0xff]
        %v187 = vld [vmem:[%s154 + $0x20] sm:$0x1]
        %v188 = vld [vmem:[%s154 + $0x28] sm:$0x1]
        %v189 = vld [vmem:[%s154 + $0x30] sm:$0x1]
        %v190 = vld [vmem:[%s154 + $0x38] sm:$0x1]
        %v191 = vld [vmem:[#allocation5] sm:$0xff]
        %v192 = vld [vmem:[#allocation5 + $0x8] sm:$0xff]
        %v193 = vld [vmem:[#allocation5 + $0x10] sm:$0xff]
        %v194 = vld [vmem:[#allocation5 + $0x18] sm:$0xff]
        %v195 = vlaneseq
        %v196 = vshrl.u32 %v195, 7
        %v197 = vadd.s32 %v196, 8
        %v198 = vadd.s32 %v196, 16
        %v199 = vadd.s32 %v196, 24
        %v200 = vadd.s32 %v196, 32
        %v201 = vadd.s32 %v196, 40
        %v202 = vadd.s32 %v196, 48
        %v203 = vadd.s32 %v196, 56
        %v204 = vadd.s32 %v196, 64
        %v205 = vadd.s32 %v196, 72
        %v206 = vadd.s32 %v196, 80
        %v207 = vadd.s32 %v196, 88
        %v208 = vadd.s32 %v196, 96
        %v209 = vadd.s32 %v196, 104
        %v210 = vadd.s32 %v196, 112
        %v211 = vadd.s32 %v196, 120
        %v212 = vperm.slane %v183, 1
        %vm213 = vcmp.eq.s32.totalorder %v196, %v212
        %vm214 = vcmp.eq.s32.totalorder %v197, %v212
        %vm215 = vcmp.eq.s32.totalorder %v198, %v212
        %vm216 = vcmp.eq.s32.totalorder %v199, %v212
        %vm217 = vcmp.eq.s32.totalorder %v200, %v212
        %vm218 = vcmp.eq.s32.totalorder %v201, %v212
        %vm219 = vcmp.eq.s32.totalorder %v202, %v212
        %vm220 = vcmp.eq.s32.totalorder %v203, %v212
        %vm221 = vcmp.eq.s32.totalorder %v204, %v212
        %vm222 = vcmp.eq.s32.totalorder %v205, %v212
        %vm223 = vcmp.eq.s32.totalorder %v206, %v212
        %vm224 = vcmp.eq.s32.totalorder %v207, %v212
        %vm225 = vcmp.eq.s32.totalorder %v208, %v212
        %vm226 = vcmp.eq.s32.totalorder %v209, %v212
        %vm227 = vcmp.eq.s32.totalorder %v210, %v212
        %vm228 = vcmp.eq.s32.totalorder %v211, %v212
        %v229 = vadd.s32 %v183, 4
        %v230 = vperm.slane %v229, 2
        %vm231 = vcmp.eq.s32.totalorder %v196, %v230
        %vm232 = vcmp.eq.s32.totalorder %v197, %v230
        %vm233 = vcmp.eq.s32.totalorder %v198, %v230
        %vm234 = vcmp.eq.s32.totalorder %v199, %v230
        %vm235 = vcmp.eq.s32.totalorder %v200, %v230
        %vm236 = vcmp.eq.s32.totalorder %v201, %v230
        %vm237 = vcmp.eq.s32.totalorder %v202, %v230
        %vm238 = vcmp.eq.s32.totalorder %v203, %v230
        %vm239 = vcmp.eq.s32.totalorder %v204, %v230
        %vm240 = vcmp.eq.s32.totalorder %v205, %v230
        %vm241 = vcmp.eq.s32.totalorder %v206, %v230
        %vm242 = vcmp.eq.s32.totalorder %v207, %v230
        %vm243 = vcmp.eq.s32.totalorder %v208, %v230
        %vm244 = vcmp.eq.s32.totalorder %v209, %v230
        %vm245 = vcmp.eq.s32.totalorder %v210, %v230
        %vm246 = vcmp.eq.s32.totalorder %v211, %v230
        %vm247 = vmor %vm213, %vm231
        %vm248 = vmor %vm214, %vm232
        %vm249 = vmor %vm215, %vm233
        %vm250 = vmor %vm216, %vm234
        %vm251 = vmor %vm217, %vm235
        %vm252 = vmor %vm218, %vm236
        %vm253 = vmor %vm219, %vm237
        %vm254 = vmor %vm220, %vm238
        %vm255 = vmor %vm221, %vm239
        %vm256 = vmor %vm222, %vm240
        %vm257 = vmor %vm223, %vm241
        %vm258 = vmor %vm224, %vm242
        %vm259 = vmor %vm225, %vm243
        %vm260 = vmor %vm226, %vm244
        %vm261 = vmor %vm227, %vm245
        %vm262 = vmor %vm228, %vm246
        %v263 = vadd.s32 %v183, 16
        %v264 = vperm.slane %v263, 3
        %vm265 = vcmp.eq.s32.totalorder %v196, %v264
        %vm266 = vcmp.eq.s32.totalorder %v197, %v264
        %vm267 = vcmp.eq.s32.totalorder %v198, %v264
        %vm268 = vcmp.eq.s32.totalorder %v199, %v264
        %vm269 = vcmp.eq.s32.totalorder %v200, %v264
        %vm270 = vcmp.eq.s32.totalorder %v201, %v264
        %vm271 = vcmp.eq.s32.totalorder %v202, %v264
        %vm272 = vcmp.eq.s32.totalorder %v203, %v264
        %vm273 = vcmp.eq.s32.totalorder %v204, %v264
        %vm274 = vcmp.eq.s32.totalorder %v205, %v264
        %vm275 = vcmp.eq.s32.totalorder %v206, %v264
        %vm276 = vcmp.eq.s32.totalorder %v207, %v264
        %vm277 = vcmp.eq.s32.totalorder %v208, %v264
        %vm278 = vcmp.eq.s32.totalorder %v209, %v264
        %vm279 = vcmp.eq.s32.totalorder %v210, %v264
        %vm280 = vcmp.eq.s32.totalorder %v211, %v264
        %vm281 = vmor %vm247, %vm265
        %vm282 = vmor %vm248, %vm266
        %vm283 = vmor %vm249, %vm267
        %vm284 = vmor %vm250, %vm268
        %vm285 = vmor %vm251, %vm269
        %vm286 = vmor %vm252, %vm270
        %vm287 = vmor %vm253, %vm271
        %vm288 = vmor %vm254, %vm272
        %vm289 = vmor %vm255, %vm273
        %vm290 = vmor %vm256, %vm274
        %vm291 = vmor %vm257, %vm275
        %vm292 = vmor %vm258, %vm276
        %vm293 = vmor %vm259, %vm277
        %vm294 = vmor %vm260, %vm278
        %vm295 = vmor %vm261, %vm279
        %vm296 = vmor %vm262, %vm280
        %v297 = vadd.s32 %v183, 28
        %v298 = vperm.slane %v297, 4
        %vm299 = vcmp.eq.s32.totalorder %v196, %v298
        %vm300 = vcmp.eq.s32.totalorder %v197, %v298
        %vm301 = vcmp.eq.s32.totalorder %v198, %v298
        %vm302 = vcmp.eq.s32.totalorder %v199, %v298
        %vm303 = vcmp.eq.s32.totalorder %v200, %v298
        %vm304 = vcmp.eq.s32.totalorder %v201, %v298
        %vm305 = vcmp.eq.s32.totalorder %v202, %v298
        %vm306 = vcmp.eq.s32.totalorder %v203, %v298
        %vm307 = vcmp.eq.s32.totalorder %v204, %v298
        %vm308 = vcmp.eq.s32.totalorder %v205, %v298
        %vm309 = vcmp.eq.s32.totalorder %v206, %v298
        %vm310 = vcmp.eq.s32.totalorder %v207, %v298
        %vm311 = vcmp.eq.s32.totalorder %v208, %v298
        %vm312 = vcmp.eq.s32.totalorder %v209, %v298
        %vm313 = vcmp.eq.s32.totalorder %v210, %v298
        %vm314 = vcmp.eq.s32.totalorder %v211, %v298
        %vm315 = vmor %vm281, %vm299
        %vm316 = vmor %vm282, %vm300
        %vm317 = vmor %vm283, %vm301
        %vm318 = vmor %vm284, %vm302
        %vm319 = vmor %vm285, %vm303
        %vm320 = vmor %vm286, %vm304
        %vm321 = vmor %vm287, %vm305
        %vm322 = vmor %vm288, %vm306
        %vm323 = vmor %vm289, %vm307
        %vm324 = vmor %vm290, %vm308
        %vm325 = vmor %vm291, %vm309
        %vm326 = vmor %vm292, %vm310
        %vm327 = vmor %vm293, %vm311
        %vm328 = vmor %vm294, %vm312
        %vm329 = vmor %vm295, %vm313
        %vm330 = vmor %vm296, %vm314
        %v331 = vadd.s32 %v183, 38
        %v332 = vperm.slane %v331, 5
        %vm333 = vcmp.eq.s32.totalorder %v196, %v332
        %vm334 = vcmp.eq.s32.totalorder %v197, %v332
        %vm335 = vcmp.eq.s32.totalorder %v198, %v332
        %vm336 = vcmp.eq.s32.totalorder %v199, %v332
        %vm337 = vcmp.eq.s32.totalorder %v200, %v332
        %vm338 = vcmp.eq.s32.totalorder %v201, %v332
        %vm339 = vcmp.eq.s32.totalorder %v202, %v332
        %vm340 = vcmp.eq.s32.totalorder %v203, %v332
        %vm341 = vcmp.eq.s32.totalorder %v204, %v332
        %vm342 = vcmp.eq.s32.totalorder %v205, %v332
        %vm343 = vcmp.eq.s32.totalorder %v206, %v332
        %vm344 = vcmp.eq.s32.totalorder %v207, %v332
        %vm345 = vcmp.eq.s32.totalorder %v208, %v332
        %vm346 = vcmp.eq.s32.totalorder %v209, %v332
        %vm347 = vcmp.eq.s32.totalorder %v210, %v332
        %vm348 = vcmp.eq.s32.totalorder %v211, %v332
        %vm349 = vmor %vm315, %vm333
        %vm350 = vmor %vm316, %vm334
        %vm351 = vmor %vm317, %vm335
        %vm352 = vmor %vm318, %vm336
        %vm353 = vmor %vm319, %vm337
        %vm354 = vmor %vm320, %vm338
        %vm355 = vmor %vm321, %vm339
        %vm356 = vmor %vm322, %vm340
        %vm357 = vmor %vm323, %vm341
        %vm358 = vmor %vm324, %vm342
        %vm359 = vmor %vm325, %vm343
        %vm360 = vmor %vm326, %vm344
        %vm361 = vmor %vm327, %vm345
        %vm362 = vmor %vm328, %vm346
        %vm363 = vmor %vm329, %vm347
        %vm364 = vmor %vm330, %vm348
        %v365 = vadd.s32 %v183, 44
        %v366 = vperm.slane %v365, 6
        %vm367 = vcmp.eq.s32.totalorder %v196, %v366
        %vm368 = vcmp.eq.s32.totalorder %v197, %v366
        %vm369 = vcmp.eq.s32.totalorder %v198, %v366
        %vm370 = vcmp.eq.s32.totalorder %v199, %v366
        %vm371 = vcmp.eq.s32.totalorder %v200, %v366
        %vm372 = vcmp.eq.s32.totalorder %v201, %v366
        %vm373 = vcmp.eq.s32.totalorder %v202, %v366
        %vm374 = vcmp.eq.s32.totalorder %v203, %v366
        %vm375 = vcmp.eq.s32.totalorder %v204, %v366
        %vm376 = vcmp.eq.s32.totalorder %v205, %v366
        %vm377 = vcmp.eq.s32.totalorder %v206, %v366
        %vm378 = vcmp.eq.s32.totalorder %v207, %v366
        %vm379 = vcmp.eq.s32.totalorder %v208, %v366
        %vm380 = vcmp.eq.s32.totalorder %v209, %v366
        %vm381 = vcmp.eq.s32.totalorder %v210, %v366
        %vm382 = vcmp.eq.s32.totalorder %v211, %v366
        %vm383 = vmor %vm349, %vm367
        %vm384 = vmor %vm350, %vm368
        %vm385 = vmor %vm351, %vm369
        %vm386 = vmor %vm352, %vm370
        %vm387 = vmor %vm353, %vm371
        %vm388 = vmor %vm354, %vm372
        %vm389 = vmor %vm355, %vm373
        %vm390 = vmor %vm356, %vm374
        %vm391 = vmor %vm357, %vm375
        %vm392 = vmor %vm358, %vm376
        %vm393 = vmor %vm359, %vm377
        %vm394 = vmor %vm360, %vm378
        %vm395 = vmor %vm361, %vm379
        %vm396 = vmor %vm362, %vm380
        %vm397 = vmor %vm363, %vm381
        %vm398 = vmor %vm364, %vm382
        %v399 = vadd.s32 %v183, 50
        %v400 = vperm.slane %v399, 7
        %vm401 = vcmp.eq.s32.totalorder %v196, %v400
        %vm402 = vcmp.eq.s32.totalorder %v197, %v400
        %vm403 = vcmp.eq.s32.totalorder %v198, %v400
        %vm404 = vcmp.eq.s32.totalorder %v199, %v400
        %vm405 = vcmp.eq.s32.totalorder %v200, %v400
        %vm406 = vcmp.eq.s32.totalorder %v201, %v400
        %vm407 = vcmp.eq.s32.totalorder %v202, %v400
        %vm408 = vcmp.eq.s32.totalorder %v203, %v400
        %vm409 = vcmp.eq.s32.totalorder %v204, %v400
        %vm410 = vcmp.eq.s32.totalorder %v205, %v400
        %vm411 = vcmp.eq.s32.totalorder %v206, %v400
        %vm412 = vcmp.eq.s32.totalorder %v207, %v400
        %vm413 = vcmp.eq.s32.totalorder %v208, %v400
        %vm414 = vcmp.eq.s32.totalorder %v209, %v400
        %vm415 = vcmp.eq.s32.totalorder %v210, %v400
        %vm416 = vcmp.eq.s32.totalorder %v211, %v400
        %vm417 = vmor %vm383, %vm401
        %vm418 = vmor %vm384, %vm402
        %vm419 = vmor %vm385, %vm403
        %vm420 = vmor %vm386, %vm404
        %vm421 = vmor %vm387, %vm405
        %vm422 = vmor %vm388, %vm406
        %vm423 = vmor %vm389, %vm407
        %vm424 = vmor %vm390, %vm408
        %vm425 = vmor %vm391, %vm409
        %vm426 = vmor %vm392, %vm410
        %vm427 = vmor %vm393, %vm411
        %vm428 = vmor %vm394, %vm412
        %vm429 = vmor %vm395, %vm413
        %vm430 = vmor %vm396, %vm414
        %vm431 = vmor %vm397, %vm415
        %vm432 = vmor %vm398, %vm416
        %v433 = vadd.s32 %v187, 52
        %v434 = vperm.slane %v433, 0
        %vm435 = vcmp.eq.s32.totalorder %v196, %v434
        %vm436 = vcmp.eq.s32.totalorder %v197, %v434
        %vm437 = vcmp.eq.s32.totalorder %v198, %v434
        %vm438 = vcmp.eq.s32.totalorder %v199, %v434
        %vm439 = vcmp.eq.s32.totalorder %v200, %v434
        %vm440 = vcmp.eq.s32.totalorder %v201, %v434
        %vm441 = vcmp.eq.s32.totalorder %v202, %v434
        %vm442 = vcmp.eq.s32.totalorder %v203, %v434
        %vm443 = vcmp.eq.s32.totalorder %v204, %v434
        %vm444 = vcmp.eq.s32.totalorder %v205, %v434
        %vm445 = vcmp.eq.s32.totalorder %v206, %v434
        %vm446 = vcmp.eq.s32.totalorder %v207, %v434
        %vm447 = vcmp.eq.s32.totalorder %v208, %v434
        %vm448 = vcmp.eq.s32.totalorder %v209, %v434
        %vm449 = vcmp.eq.s32.totalorder %v210, %v434
        %vm450 = vcmp.eq.s32.totalorder %v211, %v434
        %vm451 = vmor %vm417, %vm435
        %vm452 = vmor %vm418, %vm436
        %vm453 = vmor %vm419, %vm437
        %vm454 = vmor %vm420, %vm438
        %vm455 = vmor %vm421, %vm439
        %vm456 = vmor %vm422, %vm440
        %vm457 = vmor %vm423, %vm441
        %vm458 = vmor %vm424, %vm442
        %vm459 = vmor %vm425, %vm443
        %vm460 = vmor %vm426, %vm444
        %vm461 = vmor %vm427, %vm445
        %vm462 = vmor %vm428, %vm446
        %vm463 = vmor %vm429, %vm447
        %vm464 = vmor %vm430, %vm448
        %vm465 = vmor %vm431, %vm449
        %vm466 = vmor %vm432, %vm450
        %v467 = vsel %vm451, 1, 0
        %v468 = vsel %vm452, 1, 0
        %v469 = vsel %vm453, 1, 0
        %v470 = vsel %vm454, 1, 0
        %v471 = vsel %vm455, 1, 0
        %v472 = vsel %vm456, 1, 0
        %v473 = vsel %vm457, 1, 0
        %v474 = vsel %vm458, 1, 0
        %v475 = vsel %vm459, 1, 0
        %v476 = vsel %vm460, 1, 0
        %v477 = vsel %vm461, 1, 0
        %v478 = vsel %vm462, 1, 0
        %v479 = vsel %vm463, 1, 0
        %v480 = vsel %vm464, 1, 0
        %v481 = vsel %vm465, 1, 0
        %v482 = vsel %vm466, 1, 0
        %v483 = vcvt.s32.f32 %v467
        %v484 = vcvt.s32.f32 %v468
        %v485 = vcvt.s32.f32 %v469
        %v486 = vcvt.s32.f32 %v470
        %v487 = vcvt.s32.f32 %v471
        %v488 = vcvt.s32.f32 %v472
        %v489 = vcvt.s32.f32 %v473
        %v490 = vcvt.s32.f32 %v474
        %v491 = vcvt.s32.f32 %v475
        %v492 = vcvt.s32.f32 %v476
        %v493 = vcvt.s32.f32 %v477
        %v494 = vcvt.s32.f32 %v478
        %v495 = vcvt.s32.f32 %v479
        %v496 = vcvt.s32.f32 %v480
        %v497 = vcvt.s32.f32 %v481
        %v498 = vcvt.s32.f32 %v482
        %499 = vmatpush.msra.mxu0 %v498
        %500 = vmatpush.msra.mxu0 %v497
        %501 = vmatpush.msra.mxu0 %v496
        %502 = vmatpush.msra.mxu0 %v495
        %503 = vmatpush.msra.mxu0 %v494
        %504 = vmatpush.msra.mxu0 %v493
        %505 = vmatpush.msra.mxu0 %v492
        %506 = vmatpush.msra.mxu0 %v491
        %507 = vmatpush.msra.mxu0 %v490
        %508 = vmatpush.msra.mxu0 %v489
        %509 = vmatpush.msra.mxu0 %v488
        %510 = vmatpush.msra.mxu0 %v487
        %511 = vmatpush.msra.mxu0 %v486
        %512 = vmatpush.msra.mxu0 %v485
        %513 = vmatpush.msra.mxu0 %v484
        %514 = vmatpush.msra.mxu0 %v483
        %515 = vmatmul.f32.gmra.mxu0 %v191
        %v516 = vpop.f32.mrf.mxu0
        %v517 = vadd.f32 0.0, %v516
        %518 = vmatmul.f32.gmra.mxu0 %v192
        %v519 = vpop.f32.mrf.mxu0
        %v520 = vadd.f32 0.0, %v519
        %521 = vmatmul.f32.gmra.mxu0 %v193
        %v522 = vpop.f32.mrf.mxu0
        %v523 = vadd.f32 0.0, %v522
        %524 = vmatmul.f32.gmra.mxu0 %v194
        %v525 = vpop.f32.mrf.mxu0
        %v526 = vadd.f32 0.0, %v525
        %527 = vdwg.mxu0
        %528 = vst [vmem:[%s180] sm:$0xff] %v517
        %529 = vst [vmem:[%s180 + $0x20] sm:$0xff] %v520
        %530 = vst [vmem:[%s180 + $0x40] sm:$0xff] %v523
        %531 = vst [vmem:[%s180 + $0x60] sm:$0xff] %v526
        %v532 = vperm.slane %v184, 1
        %vm533 = vcmp.eq.s32.totalorder %v196, %v532
        %vm534 = vcmp.eq.s32.totalorder %v197, %v532
        %vm535 = vcmp.eq.s32.totalorder %v198, %v532
        %vm536 = vcmp.eq.s32.totalorder %v199, %v532
        %vm537 = vcmp.eq.s32.totalorder %v200, %v532
        %vm538 = vcmp.eq.s32.totalorder %v201, %v532
        %vm539 = vcmp.eq.s32.totalorder %v202, %v532
        %vm540 = vcmp.eq.s32.totalorder %v203, %v532
        %vm541 = vcmp.eq.s32.totalorder %v204, %v532
        %vm542 = vcmp.eq.s32.totalorder %v205, %v532
        %vm543 = vcmp.eq.s32.totalorder %v206, %v532
        %vm544 = vcmp.eq.s32.totalorder %v207, %v532
        %vm545 = vcmp.eq.s32.totalorder %v208, %v532
        %vm546 = vcmp.eq.s32.totalorder %v209, %v532
        %vm547 = vcmp.eq.s32.totalorder %v210, %v532
        %vm548 = vcmp.eq.s32.totalorder %v211, %v532
        %v549 = vadd.s32 %v184, 4
        %v550 = vperm.slane %v549, 2
        %vm551 = vcmp.eq.s32.totalorder %v196, %v550
        %vm552 = vcmp.eq.s32.totalorder %v197, %v550
        %vm553 = vcmp.eq.s32.totalorder %v198, %v550
        %vm554 = vcmp.eq.s32.totalorder %v199, %v550
        %vm555 = vcmp.eq.s32.totalorder %v200, %v550
        %vm556 = vcmp.eq.s32.totalorder %v201, %v550
        %vm557 = vcmp.eq.s32.totalorder %v202, %v550
        %vm558 = vcmp.eq.s32.totalorder %v203, %v550
        %vm559 = vcmp.eq.s32.totalorder %v204, %v550
        %vm560 = vcmp.eq.s32.totalorder %v205, %v550
        %vm561 = vcmp.eq.s32.totalorder %v206, %v550
        %vm562 = vcmp.eq.s32.totalorder %v207, %v550
        %vm563 = vcmp.eq.s32.totalorder %v208, %v550
        %vm564 = vcmp.eq.s32.totalorder %v209, %v550
        %vm565 = vcmp.eq.s32.totalorder %v210, %v550
        %vm566 = vcmp.eq.s32.totalorder %v211, %v550
        %vm567 = vmor %vm533, %vm551
        %vm568 = vmor %vm534, %vm552
        %vm569 = vmor %vm535, %vm553
        %vm570 = vmor %vm536, %vm554
        %vm571 = vmor %vm537, %vm555
        %vm572 = vmor %vm538, %vm556
        %vm573 = vmor %vm539, %vm557
        %vm574 = vmor %vm540, %vm558
        %vm575 = vmor %vm541, %vm559
        %vm576 = vmor %vm542, %vm560
        %vm577 = vmor %vm543, %vm561
        %vm578 = vmor %vm544, %vm562
        %vm579 = vmor %vm545, %vm563
        %vm580 = vmor %vm546, %vm564
        %vm581 = vmor %vm547, %vm565
        %vm582 = vmor %vm548, %vm566
        %v583 = vadd.s32 %v184, 16
        %v584 = vperm.slane %v583, 3
        %vm585 = vcmp.eq.s32.totalorder %v196, %v584
        %vm586 = vcmp.eq.s32.totalorder %v197, %v584
        %vm587 = vcmp.eq.s32.totalorder %v198, %v584
        %vm588 = vcmp.eq.s32.totalorder %v199, %v584
        %vm589 = vcmp.eq.s32.totalorder %v200, %v584
        %vm590 = vcmp.eq.s32.totalorder %v201, %v584
        %vm591 = vcmp.eq.s32.totalorder %v202, %v584
        %vm592 = vcmp.eq.s32.totalorder %v203, %v584
        %vm593 = vcmp.eq.s32.totalorder %v204, %v584
        %vm594 = vcmp.eq.s32.totalorder %v205, %v584
        %vm595 = vcmp.eq.s32.totalorder %v206, %v584
        %vm596 = vcmp.eq.s32.totalorder %v207, %v584
        %vm597 = vcmp.eq.s32.totalorder %v208, %v584
        %vm598 = vcmp.eq.s32.totalorder %v209, %v584
        %vm599 = vcmp.eq.s32.totalorder %v210, %v584
        %vm600 = vcmp.eq.s32.totalorder %v211, %v584
        %vm601 = vmor %vm567, %vm585
        %vm602 = vmor %vm568, %vm586
        %vm603 = vmor %vm569, %vm587
        %vm604 = vmor %vm570, %vm588
        %vm605 = vmor %vm571, %vm589
        %vm606 = vmor %vm572, %vm590
        %vm607 = vmor %vm573, %vm591
        %vm608 = vmor %vm574, %vm592
        %vm609 = vmor %vm575, %vm593
        %vm610 = vmor %vm576, %vm594
        %vm611 = vmor %vm577, %vm595
        %vm612 = vmor %vm578, %vm596
        %vm613 = vmor %vm579, %vm597
        %vm614 = vmor %vm580, %vm598
        %vm615 = vmor %vm581, %vm599
        %vm616 = vmor %vm582, %vm600
        %v617 = vadd.s32 %v184, 28
        %v618 = vperm.slane %v617, 4
        %vm619 = vcmp.eq.s32.totalorder %v196, %v618
        %vm620 = vcmp.eq.s32.totalorder %v197, %v618
        %vm621 = vcmp.eq.s32.totalorder %v198, %v618
        %vm622 = vcmp.eq.s32.totalorder %v199, %v618
        %vm623 = vcmp.eq.s32.totalorder %v200, %v618
        %vm624 = vcmp.eq.s32.totalorder %v201, %v618
        %vm625 = vcmp.eq.s32.totalorder %v202, %v618
        %vm626 = vcmp.eq.s32.totalorder %v203, %v618
        %vm627 = vcmp.eq.s32.totalorder %v204, %v618
        %vm628 = vcmp.eq.s32.totalorder %v205, %v618
        %vm629 = vcmp.eq.s32.totalorder %v206, %v618
        %vm630 = vcmp.eq.s32.totalorder %v207, %v618
        %vm631 = vcmp.eq.s32.totalorder %v208, %v618
        %vm632 = vcmp.eq.s32.totalorder %v209, %v618
        %vm633 = vcmp.eq.s32.totalorder %v210, %v618
        %vm634 = vcmp.eq.s32.totalorder %v211, %v618
        %vm635 = vmor %vm601, %vm619
        %vm636 = vmor %vm602, %vm620
        %vm637 = vmor %vm603, %vm621
        %vm638 = vmor %vm604, %vm622
        %vm639 = vmor %vm605, %vm623
        %vm640 = vmor %vm606, %vm624
        %vm641 = vmor %vm607, %vm625
        %vm642 = vmor %vm608, %vm626
        %vm643 = vmor %vm609, %vm627
        %vm644 = vmor %vm610, %vm628
        %vm645 = vmor %vm611, %vm629
        %vm646 = vmor %vm612, %vm630
        %vm647 = vmor %vm613, %vm631
        %vm648 = vmor %vm614, %vm632
        %vm649 = vmor %vm615, %vm633
        %vm650 = vmor %vm616, %vm634
        %v651 = vadd.s32 %v184, 38
        %v652 = vperm.slane %v651, 5
        %vm653 = vcmp.eq.s32.totalorder %v196, %v652
        %vm654 = vcmp.eq.s32.totalorder %v197, %v652
        %vm655 = vcmp.eq.s32.totalorder %v198, %v652
        %vm656 = vcmp.eq.s32.totalorder %v199, %v652
        %vm657 = vcmp.eq.s32.totalorder %v200, %v652
        %vm658 = vcmp.eq.s32.totalorder %v201, %v652
        %vm659 = vcmp.eq.s32.totalorder %v202, %v652
        %vm660 = vcmp.eq.s32.totalorder %v203, %v652
        %vm661 = vcmp.eq.s32.totalorder %v204, %v652
        %vm662 = vcmp.eq.s32.totalorder %v205, %v652
        %vm663 = vcmp.eq.s32.totalorder %v206, %v652
        %vm664 = vcmp.eq.s32.totalorder %v207, %v652
        %vm665 = vcmp.eq.s32.totalorder %v208, %v652
        %vm666 = vcmp.eq.s32.totalorder %v209, %v652
        %vm667 = vcmp.eq.s32.totalorder %v210, %v652
        %vm668 = vcmp.eq.s32.totalorder %v211, %v652
        %vm669 = vmor %vm635, %vm653
        %vm670 = vmor %vm636, %vm654
        %vm671 = vmor %vm637, %vm655
        %vm672 = vmor %vm638, %vm656
        %vm673 = vmor %vm639, %vm657
        %vm674 = vmor %vm640, %vm658
        %vm675 = vmor %vm641, %vm659
        %vm676 = vmor %vm642, %vm660
        %vm677 = vmor %vm643, %vm661
        %vm678 = vmor %vm644, %vm662
        %vm679 = vmor %vm645, %vm663
        %vm680 = vmor %vm646, %vm664
        %vm681 = vmor %vm647, %vm665
        %vm682 = vmor %vm648, %vm666
        %vm683 = vmor %vm649, %vm667
        %vm684 = vmor %vm650, %vm668
        %v685 = vadd.s32 %v184, 44
        %v686 = vperm.slane %v685, 6
        %vm687 = vcmp.eq.s32.totalorder %v196, %v686
        %vm688 = vcmp.eq.s32.totalorder %v197, %v686
        %vm689 = vcmp.eq.s32.totalorder %v198, %v686
        %vm690 = vcmp.eq.s32.totalorder %v199, %v686
        %vm691 = vcmp.eq.s32.totalorder %v200, %v686
        %vm692 = vcmp.eq.s32.totalorder %v201, %v686
        %vm693 = vcmp.eq.s32.totalorder %v202, %v686
        %vm694 = vcmp.eq.s32.totalorder %v203, %v686
        %vm695 = vcmp.eq.s32.totalorder %v204, %v686
        %vm696 = vcmp.eq.s32.totalorder %v205, %v686
        %vm697 = vcmp.eq.s32.totalorder %v206, %v686
        %vm698 = vcmp.eq.s32.totalorder %v207, %v686
        %vm699 = vcmp.eq.s32.totalorder %v208, %v686
        %vm700 = vcmp.eq.s32.totalorder %v209, %v686
        %vm701 = vcmp.eq.s32.totalorder %v210, %v686
        %vm702 = vcmp.eq.s32.totalorder %v211, %v686
        %vm703 = vmor %vm669, %vm687
        %vm704 = vmor %vm670, %vm688
        %vm705 = vmor %vm671, %vm689
        %vm706 = vmor %vm672, %vm690
        %vm707 = vmor %vm673, %vm691
        %vm708 = vmor %vm674, %vm692
        %vm709 = vmor %vm675, %vm693
        %vm710 = vmor %vm676, %vm694
        %vm711 = vmor %vm677, %vm695
        %vm712 = vmor %vm678, %vm696
        %vm713 = vmor %vm679, %vm697
        %vm714 = vmor %vm680, %vm698
        %vm715 = vmor %vm681, %vm699
        %vm716 = vmor %vm682, %vm700
        %vm717 = vmor %vm683, %vm701
        %vm718 = vmor %vm684, %vm702
        %v719 = vadd.s32 %v184, 50
        %v720 = vperm.slane %v719, 7
        %vm721 = vcmp.eq.s32.totalorder %v196, %v720
        %vm722 = vcmp.eq.s32.totalorder %v197, %v720
        %vm723 = vcmp.eq.s32.totalorder %v198, %v720
        %vm724 = vcmp.eq.s32.totalorder %v199, %v720
        %vm725 = vcmp.eq.s32.totalorder %v200, %v720
        %vm726 = vcmp.eq.s32.totalorder %v201, %v720
        %vm727 = vcmp.eq.s32.totalorder %v202, %v720
        %vm728 = vcmp.eq.s32.totalorder %v203, %v720
        %vm729 = vcmp.eq.s32.totalorder %v204, %v720
        %vm730 = vcmp.eq.s32.totalorder %v205, %v720
        %vm731 = vcmp.eq.s32.totalorder %v206, %v720
        %vm732 = vcmp.eq.s32.totalorder %v207, %v720
        %vm733 = vcmp.eq.s32.totalorder %v208, %v720
        %vm734 = vcmp.eq.s32.totalorder %v209, %v720
        %vm735 = vcmp.eq.s32.totalorder %v210, %v720
        %vm736 = vcmp.eq.s32.totalorder %v211, %v720
        %vm737 = vmor %vm703, %vm721
        %vm738 = vmor %vm704, %vm722
        %vm739 = vmor %vm705, %vm723
        %vm740 = vmor %vm706, %vm724
        %vm741 = vmor %vm707, %vm725
        %vm742 = vmor %vm708, %vm726
        %vm743 = vmor %vm709, %vm727
        %vm744 = vmor %vm710, %vm728
        %vm745 = vmor %vm711, %vm729
        %vm746 = vmor %vm712, %vm730
        %vm747 = vmor %vm713, %vm731
        %vm748 = vmor %vm714, %vm732
        %vm749 = vmor %vm715, %vm733
        %vm750 = vmor %vm716, %vm734
        %vm751 = vmor %vm717, %vm735
        %vm752 = vmor %vm718, %vm736
        %v753 = vadd.s32 %v188, 52
        %v754 = vperm.slane %v753, 0
        %vm755 = vcmp.eq.s32.totalorder %v196, %v754
        %vm756 = vcmp.eq.s32.totalorder %v197, %v754
        %vm757 = vcmp.eq.s32.totalorder %v198, %v754
        %vm758 = vcmp.eq.s32.totalorder %v199, %v754
        %vm759 = vcmp.eq.s32.totalorder %v200, %v754
        %vm760 = vcmp.eq.s32.totalorder %v201, %v754
        %vm761 = vcmp.eq.s32.totalorder %v202, %v754
        %vm762 = vcmp.eq.s32.totalorder %v203, %v754
        %vm763 = vcmp.eq.s32.totalorder %v204, %v754
        %vm764 = vcmp.eq.s32.totalorder %v205, %v754
        %vm765 = vcmp.eq.s32.totalorder %v206, %v754
        %vm766 = vcmp.eq.s32.totalorder %v207, %v754
        %vm767 = vcmp.eq.s32.totalorder %v208, %v754
        %vm768 = vcmp.eq.s32.totalorder %v209, %v754
        %vm769 = vcmp.eq.s32.totalorder %v210, %v754
        %vm770 = vcmp.eq.s32.totalorder %v211, %v754
        %vm771 = vmor %vm737, %vm755
        %vm772 = vmor %vm738, %vm756
        %vm773 = vmor %vm739, %vm757
        %vm774 = vmor %vm740, %vm758
        %vm775 = vmor %vm741, %vm759
        %vm776 = vmor %vm742, %vm760
        %vm777 = vmor %vm743, %vm761
        %vm778 = vmor %vm744, %vm762
        %vm779 = vmor %vm745, %vm763
        %vm780 = vmor %vm746, %vm764
        %vm781 = vmor %vm747, %vm765
        %vm782 = vmor %vm748, %vm766
        %vm783 = vmor %vm749, %vm767
        %vm784 = vmor %vm750, %vm768
        %vm785 = vmor %vm751, %vm769
        %vm786 = vmor %vm752, %vm770
        %v787 = vsel %vm771, 1, 0
        %v788 = vsel %vm772, 1, 0
        %v789 = vsel %vm773, 1, 0
        %v790 = vsel %vm774, 1, 0
        %v791 = vsel %vm775, 1, 0
        %v792 = vsel %vm776, 1, 0
        %v793 = vsel %vm777, 1, 0
        %v794 = vsel %vm778, 1, 0
        %v795 = vsel %vm779, 1, 0
        %v796 = vsel %vm780, 1, 0
        %v797 = vsel %vm781, 1, 0
        %v798 = vsel %vm782, 1, 0
        %v799 = vsel %vm783, 1, 0
        %v800 = vsel %vm784, 1, 0
        %v801 = vsel %vm785, 1, 0
        %v802 = vsel %vm786, 1, 0
        %v803 = vcvt.s32.f32 %v787
        %v804 = vcvt.s32.f32 %v788
        %v805 = vcvt.s32.f32 %v789
        %v806 = vcvt.s32.f32 %v790
        %v807 = vcvt.s32.f32 %v791
        %v808 = vcvt.s32.f32 %v792
        %v809 = vcvt.s32.f32 %v793
        %v810 = vcvt.s32.f32 %v794
        %v811 = vcvt.s32.f32 %v795
        %v812 = vcvt.s32.f32 %v796
        %v813 = vcvt.s32.f32 %v797
        %v814 = vcvt.s32.f32 %v798
        %v815 = vcvt.s32.f32 %v799
        %v816 = vcvt.s32.f32 %v800
        %v817 = vcvt.s32.f32 %v801
        %v818 = vcvt.s32.f32 %v802
        %819 = vmatpush.msra.mxu0 %v818
        %820 = vmatpush.msra.mxu0 %v817
        %821 = vmatpush.msra.mxu0 %v816
        %822 = vmatpush.msra.mxu0 %v815
        %823 = vmatpush.msra.mxu0 %v814
        %824 = vmatpush.msra.mxu0 %v813
        %825 = vmatpush.msra.mxu0 %v812
        %826 = vmatpush.msra.mxu0 %v811
        %827 = vmatpush.msra.mxu0 %v810
        %828 = vmatpush.msra.mxu0 %v809
        %829 = vmatpush.msra.mxu0 %v808
        %830 = vmatpush.msra.mxu0 %v807
        %831 = vmatpush.msra.mxu0 %v806
        %832 = vmatpush.msra.mxu0 %v805
        %833 = vmatpush.msra.mxu0 %v804
        %834 = vmatpush.msra.mxu0 %v803
        %835 = vmatmul.f32.gmra.mxu0 %v191
        %v836 = vpop.f32.mrf.mxu0
        %v837 = vadd.f32 0.0, %v836
        %838 = vmatmul.f32.gmra.mxu0 %v192
        %v839 = vpop.f32.mrf.mxu0
        %v840 = vadd.f32 0.0, %v839
        %841 = vmatmul.f32.gmra.mxu0 %v193
        %v842 = vpop.f32.mrf.mxu0
        %v843 = vadd.f32 0.0, %v842
        %844 = vmatmul.f32.gmra.mxu0 %v194
        %v845 = vpop.f32.mrf.mxu0
        %v846 = vadd.f32 0.0, %v845
        %847 = vdwg.mxu0
        %848 = vst [vmem:[%s180 + $0x8] sm:$0xff] %v837
        %849 = vst [vmem:[%s180 + $0x28] sm:$0xff] %v840
        %850 = vst [vmem:[%s180 + $0x48] sm:$0xff] %v843
        %851 = vst [vmem:[%s180 + $0x68] sm:$0xff] %v846
        %v852 = vperm.slane %v185, 1
        %vm853 = vcmp.eq.s32.totalorder %v196, %v852
        %vm854 = vcmp.eq.s32.totalorder %v197, %v852
        %vm855 = vcmp.eq.s32.totalorder %v198, %v852
        %vm856 = vcmp.eq.s32.totalorder %v199, %v852
        %vm857 = vcmp.eq.s32.totalorder %v200, %v852
        %vm858 = vcmp.eq.s32.totalorder %v201, %v852
        %vm859 = vcmp.eq.s32.totalorder %v202, %v852
        %vm860 = vcmp.eq.s32.totalorder %v203, %v852
        %vm861 = vcmp.eq.s32.totalorder %v204, %v852
        %vm862 = vcmp.eq.s32.totalorder %v205, %v852
        %vm863 = vcmp.eq.s32.totalorder %v206, %v852
        %vm864 = vcmp.eq.s32.totalorder %v207, %v852
        %vm865 = vcmp.eq.s32.totalorder %v208, %v852
        %vm866 = vcmp.eq.s32.totalorder %v209, %v852
        %vm867 = vcmp.eq.s32.totalorder %v210, %v852
        %vm868 = vcmp.eq.s32.totalorder %v211, %v852
        %v869 = vadd.s32 %v185, 4
        %v870 = vperm.slane %v869, 2
        %vm871 = vcmp.eq.s32.totalorder %v196, %v870
        %vm872 = vcmp.eq.s32.totalorder %v197, %v870
        %vm873 = vcmp.eq.s32.totalorder %v198, %v870
        %vm874 = vcmp.eq.s32.totalorder %v199, %v870
        %vm875 = vcmp.eq.s32.totalorder %v200, %v870
        %vm876 = vcmp.eq.s32.totalorder %v201, %v870
        %vm877 = vcmp.eq.s32.totalorder %v202, %v870
        %vm878 = vcmp.eq.s32.totalorder %v203, %v870
        %vm879 = vcmp.eq.s32.totalorder %v204, %v870
        %vm880 = vcmp.eq.s32.totalorder %v205, %v870
        %vm881 = vcmp.eq.s32.totalorder %v206, %v870
        %vm882 = vcmp.eq.s32.totalorder %v207, %v870
        %vm883 = vcmp.eq.s32.totalorder %v208, %v870
        %vm884 = vcmp.eq.s32.totalorder %v209, %v870
        %vm885 = vcmp.eq.s32.totalorder %v210, %v870
        %vm886 = vcmp.eq.s32.totalorder %v211, %v870
        %vm887 = vmor %vm853, %vm871
        %vm888 = vmor %vm854, %vm872
        %vm889 = vmor %vm855, %vm873
        %vm890 = vmor %vm856, %vm874
        %vm891 = vmor %vm857, %vm875
        %vm892 = vmor %vm858, %vm876
        %vm893 = vmor %vm859, %vm877
        %vm894 = vmor %vm860, %vm878
        %vm895 = vmor %vm861, %vm879
        %vm896 = vmor %vm862, %vm880
        %vm897 = vmor %vm863, %vm881
        %vm898 = vmor %vm864, %vm882
        %vm899 = vmor %vm865, %vm883
        %vm900 = vmor %vm866, %vm884
        %vm901 = vmor %vm867, %vm885
        %vm902 = vmor %vm868, %vm886
        %v903 = vadd.s32 %v185, 16
        %v904 = vperm.slane %v903, 3
        %vm905 = vcmp.eq.s32.totalorder %v196, %v904
        %vm906 = vcmp.eq.s32.totalorder %v197, %v904
        %vm907 = vcmp.eq.s32.totalorder %v198, %v904
        %vm908 = vcmp.eq.s32.totalorder %v199, %v904
        %vm909 = vcmp.eq.s32.totalorder %v200, %v904
        %vm910 = vcmp.eq.s32.totalorder %v201, %v904
        %vm911 = vcmp.eq.s32.totalorder %v202, %v904
        %vm912 = vcmp.eq.s32.totalorder %v203, %v904
        %vm913 = vcmp.eq.s32.totalorder %v204, %v904
        %vm914 = vcmp.eq.s32.totalorder %v205, %v904
        %vm915 = vcmp.eq.s32.totalorder %v206, %v904
        %vm916 = vcmp.eq.s32.totalorder %v207, %v904
        %vm917 = vcmp.eq.s32.totalorder %v208, %v904
        %vm918 = vcmp.eq.s32.totalorder %v209, %v904
        %vm919 = vcmp.eq.s32.totalorder %v210, %v904
        %vm920 = vcmp.eq.s32.totalorder %v211, %v904
        %vm921 = vmor %vm887, %vm905
        %vm922 = vmor %vm888, %vm906
        %vm923 = vmor %vm889, %vm907
        %vm924 = vmor %vm890, %vm908
        %vm925 = vmor %vm891, %vm909
        %vm926 = vmor %vm892, %vm910
        %vm927 = vmor %vm893, %vm911
        %vm928 = vmor %vm894, %vm912
        %vm929 = vmor %vm895, %vm913
        %vm930 = vmor %vm896, %vm914
        %vm931 = vmor %vm897, %vm915
        %vm932 = vmor %vm898, %vm916
        %vm933 = vmor %vm899, %vm917
        %vm934 = vmor %vm900, %vm918
        %vm935 = vmor %vm901, %vm919
        %vm936 = vmor %vm902, %vm920
        %v937 = vadd.s32 %v185, 28
        %v938 = vperm.slane %v937, 4
        %vm939 = vcmp.eq.s32.totalorder %v196, %v938
        %vm940 = vcmp.eq.s32.totalorder %v197, %v938
        %vm941 = vcmp.eq.s32.totalorder %v198, %v938
        %vm942 = vcmp.eq.s32.totalorder %v199, %v938
        %vm943 = vcmp.eq.s32.totalorder %v200, %v938
        %vm944 = vcmp.eq.s32.totalorder %v201, %v938
        %vm945 = vcmp.eq.s32.totalorder %v202, %v938
        %vm946 = vcmp.eq.s32.totalorder %v203, %v938
        %vm947 = vcmp.eq.s32.totalorder %v204, %v938
        %vm948 = vcmp.eq.s32.totalorder %v205, %v938
        %vm949 = vcmp.eq.s32.totalorder %v206, %v938
        %vm950 = vcmp.eq.s32.totalorder %v207, %v938
        %vm951 = vcmp.eq.s32.totalorder %v208, %v938
        %vm952 = vcmp.eq.s32.totalorder %v209, %v938
        %vm953 = vcmp.eq.s32.totalorder %v210, %v938
        %vm954 = vcmp.eq.s32.totalorder %v211, %v938
        %vm955 = vmor %vm921, %vm939
        %vm956 = vmor %vm922, %vm940
        %vm957 = vmor %vm923, %vm941
        %vm958 = vmor %vm924, %vm942
        %vm959 = vmor %vm925, %vm943
        %vm960 = vmor %vm926, %vm944
        %vm961 = vmor %vm927, %vm945
        %vm962 = vmor %vm928, %vm946
        %vm963 = vmor %vm929, %vm947
        %vm964 = vmor %vm930, %vm948
        %vm965 = vmor %vm931, %vm949
        %vm966 = vmor %vm932, %vm950
        %vm967 = vmor %vm933, %vm951
        %vm968 = vmor %vm934, %vm952
        %vm969 = vmor %vm935, %vm953
        %vm970 = vmor %vm936, %vm954
        %v971 = vadd.s32 %v185, 38
        %v972 = vperm.slane %v971, 5
        %vm973 = vcmp.eq.s32.totalorder %v196, %v972
        %vm974 = vcmp.eq.s32.totalorder %v197, %v972
        %vm975 = vcmp.eq.s32.totalorder %v198, %v972
        %vm976 = vcmp.eq.s32.totalorder %v199, %v972
        %vm977 = vcmp.eq.s32.totalorder %v200, %v972
        %vm978 = vcmp.eq.s32.totalorder %v201, %v972
        %vm979 = vcmp.eq.s32.totalorder %v202, %v972
        %vm980 = vcmp.eq.s32.totalorder %v203, %v972
        %vm981 = vcmp.eq.s32.totalorder %v204, %v972
        %vm982 = vcmp.eq.s32.totalorder %v205, %v972
        %vm983 = vcmp.eq.s32.totalorder %v206, %v972
        %vm984 = vcmp.eq.s32.totalorder %v207, %v972
        %vm985 = vcmp.eq.s32.totalorder %v208, %v972
        %vm986 = vcmp.eq.s32.totalorder %v209, %v972
        %vm987 = vcmp.eq.s32.totalorder %v210, %v972
        %vm988 = vcmp.eq.s32.totalorder %v211, %v972
        %vm989 = vmor %vm955, %vm973
        %vm990 = vmor %vm956, %vm974
        %vm991 = vmor %vm957, %vm975
        %vm992 = vmor %vm958, %vm976
        %vm993 = vmor %vm959, %vm977
        %vm994 = vmor %vm960, %vm978
        %vm995 = vmor %vm961, %vm979
        %vm996 = vmor %vm962, %vm980
        %vm997 = vmor %vm963, %vm981
        %vm998 = vmor %vm964, %vm982
        %vm999 = vmor %vm965, %vm983
        %vm1000 = vmor %vm966, %vm984
        %vm1001 = vmor %vm967, %vm985
        %vm1002 = vmor %vm968, %vm986
        %vm1003 = vmor %vm969, %vm987
        %vm1004 = vmor %vm970, %vm988
        %v1005 = vadd.s32 %v185, 44
        %v1006 = vperm.slane %v1005, 6
        %vm1007 = vcmp.eq.s32.totalorder %v196, %v1006
        %vm1008 = vcmp.eq.s32.totalorder %v197, %v1006
        %vm1009 = vcmp.eq.s32.totalorder %v198, %v1006
        %vm1010 = vcmp.eq.s32.totalorder %v199, %v1006
        %vm1011 = vcmp.eq.s32.totalorder %v200, %v1006
        %vm1012 = vcmp.eq.s32.totalorder %v201, %v1006
        %vm1013 = vcmp.eq.s32.totalorder %v202, %v1006
        %vm1014 = vcmp.eq.s32.totalorder %v203, %v1006
        %vm1015 = vcmp.eq.s32.totalorder %v204, %v1006
        %vm1016 = vcmp.eq.s32.totalorder %v205, %v1006
        %vm1017 = vcmp.eq.s32.totalorder %v206, %v1006
        %vm1018 = vcmp.eq.s32.totalorder %v207, %v1006
        %vm1019 = vcmp.eq.s32.totalorder %v208, %v1006
        %vm1020 = vcmp.eq.s32.totalorder %v209, %v1006
        %vm1021 = vcmp.eq.s32.totalorder %v210, %v1006
        %vm1022 = vcmp.eq.s32.totalorder %v211, %v1006
        %vm1023 = vmor %vm989, %vm1007
        %vm1024 = vmor %vm990, %vm1008
        %vm1025 = vmor %vm991, %vm1009
        %vm1026 = vmor %vm992, %vm1010
        %vm1027 = vmor %vm993, %vm1011
        %vm1028 = vmor %vm994, %vm1012
        %vm1029 = vmor %vm995, %vm1013
        %vm1030 = vmor %vm996, %vm1014
        %vm1031 = vmor %vm997, %vm1015
        %vm1032 = vmor %vm998, %vm1016
        %vm1033 = vmor %vm999, %vm1017
        %vm1034 = vmor %vm1000, %vm1018
        %vm1035 = vmor %vm1001, %vm1019
        %vm1036 = vmor %vm1002, %vm1020
        %vm1037 = vmor %vm1003, %vm1021
        %vm1038 = vmor %vm1004, %vm1022
        %v1039 = vadd.s32 %v185, 50
        %v1040 = vperm.slane %v1039, 7
        %vm1041 = vcmp.eq.s32.totalorder %v196, %v1040
        %vm1042 = vcmp.eq.s32.totalorder %v197, %v1040
        %vm1043 = vcmp.eq.s32.totalorder %v198, %v1040
        %vm1044 = vcmp.eq.s32.totalorder %v199, %v1040
        %vm1045 = vcmp.eq.s32.totalorder %v200, %v1040
        %vm1046 = vcmp.eq.s32.totalorder %v201, %v1040
        %vm1047 = vcmp.eq.s32.totalorder %v202, %v1040
        %vm1048 = vcmp.eq.s32.totalorder %v203, %v1040
        %vm1049 = vcmp.eq.s32.totalorder %v204, %v1040
        %vm1050 = vcmp.eq.s32.totalorder %v205, %v1040
        %vm1051 = vcmp.eq.s32.totalorder %v206, %v1040
        %vm1052 = vcmp.eq.s32.totalorder %v207, %v1040
        %vm1053 = vcmp.eq.s32.totalorder %v208, %v1040
        %vm1054 = vcmp.eq.s32.totalorder %v209, %v1040
        %vm1055 = vcmp.eq.s32.totalorder %v210, %v1040
        %vm1056 = vcmp.eq.s32.totalorder %v211, %v1040
        %vm1057 = vmor %vm1023, %vm1041
        %vm1058 = vmor %vm1024, %vm1042
        %vm1059 = vmor %vm1025, %vm1043
        %vm1060 = vmor %vm1026, %vm1044
        %vm1061 = vmor %vm1027, %vm1045
        %vm1062 = vmor %vm1028, %vm1046
        %vm1063 = vmor %vm1029, %vm1047
        %vm1064 = vmor %vm1030, %vm1048
        %vm1065 = vmor %vm1031, %vm1049
        %vm1066 = vmor %vm1032, %vm1050
        %vm1067 = vmor %vm1033, %vm1051
        %vm1068 = vmor %vm1034, %vm1052
        %vm1069 = vmor %vm1035, %vm1053
        %vm1070 = vmor %vm1036, %vm1054
        %vm1071 = vmor %vm1037, %vm1055
        %vm1072 = vmor %vm1038, %vm1056
        %v1073 = vadd.s32 %v189, 52
        %v1074 = vperm.slane %v1073, 0
        %vm1075 = vcmp.eq.s32.totalorder %v196, %v1074
        %vm1076 = vcmp.eq.s32.totalorder %v197, %v1074
        %vm1077 = vcmp.eq.s32.totalorder %v198, %v1074
        %vm1078 = vcmp.eq.s32.totalorder %v199, %v1074
        %vm1079 = vcmp.eq.s32.totalorder %v200, %v1074
        %vm1080 = vcmp.eq.s32.totalorder %v201, %v1074
        %vm1081 = vcmp.eq.s32.totalorder %v202, %v1074
        %vm1082 = vcmp.eq.s32.totalorder %v203, %v1074
        %vm1083 = vcmp.eq.s32.totalorder %v204, %v1074
        %vm1084 = vcmp.eq.s32.totalorder %v205, %v1074
        %vm1085 = vcmp.eq.s32.totalorder %v206, %v1074
        %vm1086 = vcmp.eq.s32.totalorder %v207, %v1074
        %vm1087 = vcmp.eq.s32.totalorder %v208, %v1074
        %vm1088 = vcmp.eq.s32.totalorder %v209, %v1074
        %vm1089 = vcmp.eq.s32.totalorder %v210, %v1074
        %vm1090 = vcmp.eq.s32.totalorder %v211, %v1074
        %vm1091 = vmor %vm1057, %vm1075
        %vm1092 = vmor %vm1058, %vm1076
        %vm1093 = vmor %vm1059, %vm1077
        %vm1094 = vmor %vm1060, %vm1078
        %vm1095 = vmor %vm1061, %vm1079
        %vm1096 = vmor %vm1062, %vm1080
        %vm1097 = vmor %vm1063, %vm1081
        %vm1098 = vmor %vm1064, %vm1082
        %vm1099 = vmor %vm1065, %vm1083
        %vm1100 = vmor %vm1066, %vm1084
        %vm1101 = vmor %vm1067, %vm1085
        %vm1102 = vmor %vm1068, %vm1086
        %vm1103 = vmor %vm1069, %vm1087
        %vm1104 = vmor %vm1070, %vm1088
        %vm1105 = vmor %vm1071, %vm1089
        %vm1106 = vmor %vm1072, %vm1090
        %v1107 = vsel %vm1091, 1, 0
        %v1108 = vsel %vm1092, 1, 0
        %v1109 = vsel %vm1093, 1, 0
        %v1110 = vsel %vm1094, 1, 0
        %v1111 = vsel %vm1095, 1, 0
        %v1112 = vsel %vm1096, 1, 0
        %v1113 = vsel %vm1097, 1, 0
        %v1114 = vsel %vm1098, 1, 0
        %v1115 = vsel %vm1099, 1, 0
        %v1116 = vsel %vm1100, 1, 0
        %v1117 = vsel %vm1101, 1, 0
        %v1118 = vsel %vm1102, 1, 0
        %v1119 = vsel %vm1103, 1, 0
        %v1120 = vsel %vm1104, 1, 0
        %v1121 = vsel %vm1105, 1, 0
        %v1122 = vsel %vm1106, 1, 0
        %v1123 = vcvt.s32.f32 %v1107
        %v1124 = vcvt.s32.f32 %v1108
        %v1125 = vcvt.s32.f32 %v1109
        %v1126 = vcvt.s32.f32 %v1110
        %v1127 = vcvt.s32.f32 %v1111
        %v1128 = vcvt.s32.f32 %v1112
        %v1129 = vcvt.s32.f32 %v1113
        %v1130 = vcvt.s32.f32 %v1114
        %v1131 = vcvt.s32.f32 %v1115
        %v1132 = vcvt.s32.f32 %v1116
        %v1133 = vcvt.s32.f32 %v1117
        %v1134 = vcvt.s32.f32 %v1118
        %v1135 = vcvt.s32.f32 %v1119
        %v1136 = vcvt.s32.f32 %v1120
        %v1137 = vcvt.s32.f32 %v1121
        %v1138 = vcvt.s32.f32 %v1122
        %1139 = vmatpush.msra.mxu0 %v1138
        %1140 = vmatpush.msra.mxu0 %v1137
        %1141 = vmatpush.msra.mxu0 %v1136
        %1142 = vmatpush.msra.mxu0 %v1135
        %1143 = vmatpush.msra.mxu0 %v1134
        %1144 = vmatpush.msra.mxu0 %v1133
        %1145 = vmatpush.msra.mxu0 %v1132
        %1146 = vmatpush.msra.mxu0 %v1131
        %1147 = vmatpush.msra.mxu0 %v1130
        %1148 = vmatpush.msra.mxu0 %v1129
        %1149 = vmatpush.msra.mxu0 %v1128
        %1150 = vmatpush.msra.mxu0 %v1127
        %1151 = vmatpush.msra.mxu0 %v1126
        %1152 = vmatpush.msra.mxu0 %v1125
        %1153 = vmatpush.msra.mxu0 %v1124
        %1154 = vmatpush.msra.mxu0 %v1123
        %1155 = vmatmul.f32.gmra.mxu0 %v191
        %v1156 = vpop.f32.mrf.mxu0
        %v1157 = vadd.f32 0.0, %v1156
        %1158 = vmatmul.f32.gmra.mxu0 %v192
        %v1159 = vpop.f32.mrf.mxu0
        %v1160 = vadd.f32 0.0, %v1159
        %1161 = vmatmul.f32.gmra.mxu0 %v193
        %v1162 = vpop.f32.mrf.mxu0
        %v1163 = vadd.f32 0.0, %v1162
        %1164 = vmatmul.f32.gmra.mxu0 %v194
        %v1165 = vpop.f32.mrf.mxu0
        %v1166 = vadd.f32 0.0, %v1165
        %1167 = vdwg.mxu0
        %1168 = vst [vmem:[%s180 + $0x10] sm:$0xff] %v1157
        %1169 = vst [vmem:[%s180 + $0x30] sm:$0xff] %v1160
        %1170 = vst [vmem:[%s180 + $0x50] sm:$0xff] %v1163
        %1171 = vst [vmem:[%s180 + $0x70] sm:$0xff] %v1166
        %v1172 = vperm.slane %v186, 1
        %vm1173 = vcmp.eq.s32.totalorder %v196, %v1172
        %vm1174 = vcmp.eq.s32.totalorder %v197, %v1172
        %vm1175 = vcmp.eq.s32.totalorder %v198, %v1172
        %vm1176 = vcmp.eq.s32.totalorder %v199, %v1172
        %vm1177 = vcmp.eq.s32.totalorder %v200, %v1172
        %vm1178 = vcmp.eq.s32.totalorder %v201, %v1172
        %vm1179 = vcmp.eq.s32.totalorder %v202, %v1172
        %vm1180 = vcmp.eq.s32.totalorder %v203, %v1172
        %vm1181 = vcmp.eq.s32.totalorder %v204, %v1172
        %vm1182 = vcmp.eq.s32.totalorder %v205, %v1172
        %vm1183 = vcmp.eq.s32.totalorder %v206, %v1172
        %vm1184 = vcmp.eq.s32.totalorder %v207, %v1172
        %vm1185 = vcmp.eq.s32.totalorder %v208, %v1172
        %vm1186 = vcmp.eq.s32.totalorder %v209, %v1172
        %vm1187 = vcmp.eq.s32.totalorder %v210, %v1172
        %vm1188 = vcmp.eq.s32.totalorder %v211, %v1172
        %v1189 = vadd.s32 %v186, 4
        %v1190 = vperm.slane %v1189, 2
        %vm1191 = vcmp.eq.s32.totalorder %v196, %v1190
        %vm1192 = vcmp.eq.s32.totalorder %v197, %v1190
        %vm1193 = vcmp.eq.s32.totalorder %v198, %v1190
        %vm1194 = vcmp.eq.s32.totalorder %v199, %v1190
        %vm1195 = vcmp.eq.s32.totalorder %v200, %v1190
        %vm1196 = vcmp.eq.s32.totalorder %v201, %v1190
        %vm1197 = vcmp.eq.s32.totalorder %v202, %v1190
        %vm1198 = vcmp.eq.s32.totalorder %v203, %v1190
        %vm1199 = vcmp.eq.s32.totalorder %v204, %v1190
        %vm1200 = vcmp.eq.s32.totalorder %v205, %v1190
        %vm1201 = vcmp.eq.s32.totalorder %v206, %v1190
        %vm1202 = vcmp.eq.s32.totalorder %v207, %v1190
        %vm1203 = vcmp.eq.s32.totalorder %v208, %v1190
        %vm1204 = vcmp.eq.s32.totalorder %v209, %v1190
        %vm1205 = vcmp.eq.s32.totalorder %v210, %v1190
        %vm1206 = vcmp.eq.s32.totalorder %v211, %v1190
        %vm1207 = vmor %vm1173, %vm1191
        %vm1208 = vmor %vm1174, %vm1192
        %vm1209 = vmor %vm1175, %vm1193
        %vm1210 = vmor %vm1176, %vm1194
        %vm1211 = vmor %vm1177, %vm1195
        %vm1212 = vmor %vm1178, %vm1196
        %vm1213 = vmor %vm1179, %vm1197
        %vm1214 = vmor %vm1180, %vm1198
        %vm1215 = vmor %vm1181, %vm1199
        %vm1216 = vmor %vm1182, %vm1200
        %vm1217 = vmor %vm1183, %vm1201
        %vm1218 = vmor %vm1184, %vm1202
        %vm1219 = vmor %vm1185, %vm1203
        %vm1220 = vmor %vm1186, %vm1204
        %vm1221 = vmor %vm1187, %vm1205
        %vm1222 = vmor %vm1188, %vm1206
        %v1223 = vadd.s32 %v186, 16
        %v1224 = vperm.slane %v1223, 3
        %vm1225 = vcmp.eq.s32.totalorder %v196, %v1224
        %vm1226 = vcmp.eq.s32.totalorder %v197, %v1224
        %vm1227 = vcmp.eq.s32.totalorder %v198, %v1224
        %vm1228 = vcmp.eq.s32.totalorder %v199, %v1224
        %vm1229 = vcmp.eq.s32.totalorder %v200, %v1224
        %vm1230 = vcmp.eq.s32.totalorder %v201, %v1224
        %vm1231 = vcmp.eq.s32.totalorder %v202, %v1224
        %vm1232 = vcmp.eq.s32.totalorder %v203, %v1224
        %vm1233 = vcmp.eq.s32.totalorder %v204, %v1224
        %vm1234 = vcmp.eq.s32.totalorder %v205, %v1224
        %vm1235 = vcmp.eq.s32.totalorder %v206, %v1224
        %vm1236 = vcmp.eq.s32.totalorder %v207, %v1224
        %vm1237 = vcmp.eq.s32.totalorder %v208, %v1224
        %vm1238 = vcmp.eq.s32.totalorder %v209, %v1224
        %vm1239 = vcmp.eq.s32.totalorder %v210, %v1224
        %vm1240 = vcmp.eq.s32.totalorder %v211, %v1224
        %vm1241 = vmor %vm1207, %vm1225
        %vm1242 = vmor %vm1208, %vm1226
        %vm1243 = vmor %vm1209, %vm1227
        %vm1244 = vmor %vm1210, %vm1228
        %vm1245 = vmor %vm1211, %vm1229
        %vm1246 = vmor %vm1212, %vm1230
        %vm1247 = vmor %vm1213, %vm1231
        %vm1248 = vmor %vm1214, %vm1232
        %vm1249 = vmor %vm1215, %vm1233
        %vm1250 = vmor %vm1216, %vm1234
        %vm1251 = vmor %vm1217, %vm1235
        %vm1252 = vmor %vm1218, %vm1236
        %vm1253 = vmor %vm1219, %vm1237
        %vm1254 = vmor %vm1220, %vm1238
        %vm1255 = vmor %vm1221, %vm1239
        %vm1256 = vmor %vm1222, %vm1240
        %v1257 = vadd.s32 %v186, 28
        %v1258 = vperm.slane %v1257, 4
        %vm1259 = vcmp.eq.s32.totalorder %v196, %v1258
        %vm1260 = vcmp.eq.s32.totalorder %v197, %v1258
        %vm1261 = vcmp.eq.s32.totalorder %v198, %v1258
        %vm1262 = vcmp.eq.s32.totalorder %v199, %v1258
        %vm1263 = vcmp.eq.s32.totalorder %v200, %v1258
        %vm1264 = vcmp.eq.s32.totalorder %v201, %v1258
        %vm1265 = vcmp.eq.s32.totalorder %v202, %v1258
        %vm1266 = vcmp.eq.s32.totalorder %v203, %v1258
        %vm1267 = vcmp.eq.s32.totalorder %v204, %v1258
        %vm1268 = vcmp.eq.s32.totalorder %v205, %v1258
        %vm1269 = vcmp.eq.s32.totalorder %v206, %v1258
        %vm1270 = vcmp.eq.s32.totalorder %v207, %v1258
        %vm1271 = vcmp.eq.s32.totalorder %v208, %v1258
        %vm1272 = vcmp.eq.s32.totalorder %v209, %v1258
        %vm1273 = vcmp.eq.s32.totalorder %v210, %v1258
        %vm1274 = vcmp.eq.s32.totalorder %v211, %v1258
        %vm1275 = vmor %vm1241, %vm1259
        %vm1276 = vmor %vm1242, %vm1260
        %vm1277 = vmor %vm1243, %vm1261
        %vm1278 = vmor %vm1244, %vm1262
        %vm1279 = vmor %vm1245, %vm1263
        %vm1280 = vmor %vm1246, %vm1264
        %vm1281 = vmor %vm1247, %vm1265
        %vm1282 = vmor %vm1248, %vm1266
        %vm1283 = vmor %vm1249, %vm1267
        %vm1284 = vmor %vm1250, %vm1268
        %vm1285 = vmor %vm1251, %vm1269
        %vm1286 = vmor %vm1252, %vm1270
        %vm1287 = vmor %vm1253, %vm1271
        %vm1288 = vmor %vm1254, %vm1272
        %vm1289 = vmor %vm1255, %vm1273
        %vm1290 = vmor %vm1256, %vm1274
        %v1291 = vadd.s32 %v186, 38
        %v1292 = vperm.slane %v1291, 5
        %vm1293 = vcmp.eq.s32.totalorder %v196, %v1292
        %vm1294 = vcmp.eq.s32.totalorder %v197, %v1292
        %vm1295 = vcmp.eq.s32.totalorder %v198, %v1292
        %vm1296 = vcmp.eq.s32.totalorder %v199, %v1292
        %vm1297 = vcmp.eq.s32.totalorder %v200, %v1292
        %vm1298 = vcmp.eq.s32.totalorder %v201, %v1292
        %vm1299 = vcmp.eq.s32.totalorder %v202, %v1292
        %vm1300 = vcmp.eq.s32.totalorder %v203, %v1292
        %vm1301 = vcmp.eq.s32.totalorder %v204, %v1292
        %vm1302 = vcmp.eq.s32.totalorder %v205, %v1292
        %vm1303 = vcmp.eq.s32.totalorder %v206, %v1292
        %vm1304 = vcmp.eq.s32.totalorder %v207, %v1292
        %vm1305 = vcmp.eq.s32.totalorder %v208, %v1292
        %vm1306 = vcmp.eq.s32.totalorder %v209, %v1292
        %vm1307 = vcmp.eq.s32.totalorder %v210, %v1292
        %vm1308 = vcmp.eq.s32.totalorder %v211, %v1292
        %vm1309 = vmor %vm1275, %vm1293
        %vm1310 = vmor %vm1276, %vm1294
        %vm1311 = vmor %vm1277, %vm1295
        %vm1312 = vmor %vm1278, %vm1296
        %vm1313 = vmor %vm1279, %vm1297
        %vm1314 = vmor %vm1280, %vm1298
        %vm1315 = vmor %vm1281, %vm1299
        %vm1316 = vmor %vm1282, %vm1300
        %vm1317 = vmor %vm1283, %vm1301
        %vm1318 = vmor %vm1284, %vm1302
        %vm1319 = vmor %vm1285, %vm1303
        %vm1320 = vmor %vm1286, %vm1304
        %vm1321 = vmor %vm1287, %vm1305
        %vm1322 = vmor %vm1288, %vm1306
        %vm1323 = vmor %vm1289, %vm1307
        %vm1324 = vmor %vm1290, %vm1308
        %v1325 = vadd.s32 %v186, 44
        %v1326 = vperm.slane %v1325, 6
        %vm1327 = vcmp.eq.s32.totalorder %v196, %v1326
        %vm1328 = vcmp.eq.s32.totalorder %v197, %v1326
        %vm1329 = vcmp.eq.s32.totalorder %v198, %v1326
        %vm1330 = vcmp.eq.s32.totalorder %v199, %v1326
        %vm1331 = vcmp.eq.s32.totalorder %v200, %v1326
        %vm1332 = vcmp.eq.s32.totalorder %v201, %v1326
        %vm1333 = vcmp.eq.s32.totalorder %v202, %v1326
        %vm1334 = vcmp.eq.s32.totalorder %v203, %v1326
        %vm1335 = vcmp.eq.s32.totalorder %v204, %v1326
        %vm1336 = vcmp.eq.s32.totalorder %v205, %v1326
        %vm1337 = vcmp.eq.s32.totalorder %v206, %v1326
        %vm1338 = vcmp.eq.s32.totalorder %v207, %v1326
        %vm1339 = vcmp.eq.s32.totalorder %v208, %v1326
        %vm1340 = vcmp.eq.s32.totalorder %v209, %v1326
        %vm1341 = vcmp.eq.s32.totalorder %v210, %v1326
        %vm1342 = vcmp.eq.s32.totalorder %v211, %v1326
        %vm1343 = vmor %vm1309, %vm1327
        %vm1344 = vmor %vm1310, %vm1328
        %vm1345 = vmor %vm1311, %vm1329
        %vm1346 = vmor %vm1312, %vm1330
        %vm1347 = vmor %vm1313, %vm1331
        %vm1348 = vmor %vm1314, %vm1332
        %vm1349 = vmor %vm1315, %vm1333
        %vm1350 = vmor %vm1316, %vm1334
        %vm1351 = vmor %vm1317, %vm1335
        %vm1352 = vmor %vm1318, %vm1336
        %vm1353 = vmor %vm1319, %vm1337
        %vm1354 = vmor %vm1320, %vm1338
        %vm1355 = vmor %vm1321, %vm1339
        %vm1356 = vmor %vm1322, %vm1340
        %vm1357 = vmor %vm1323, %vm1341
        %vm1358 = vmor %vm1324, %vm1342
        %v1359 = vadd.s32 %v186, 50
        %v1360 = vperm.slane %v1359, 7
        %vm1361 = vcmp.eq.s32.totalorder %v196, %v1360
        %vm1362 = vcmp.eq.s32.totalorder %v197, %v1360
        %vm1363 = vcmp.eq.s32.totalorder %v198, %v1360
        %vm1364 = vcmp.eq.s32.totalorder %v199, %v1360
        %vm1365 = vcmp.eq.s32.totalorder %v200, %v1360
        %vm1366 = vcmp.eq.s32.totalorder %v201, %v1360
        %vm1367 = vcmp.eq.s32.totalorder %v202, %v1360
        %vm1368 = vcmp.eq.s32.totalorder %v203, %v1360
        %vm1369 = vcmp.eq.s32.totalorder %v204, %v1360
        %vm1370 = vcmp.eq.s32.totalorder %v205, %v1360
        %vm1371 = vcmp.eq.s32.totalorder %v206, %v1360
        %vm1372 = vcmp.eq.s32.totalorder %v207, %v1360
        %vm1373 = vcmp.eq.s32.totalorder %v208, %v1360
        %vm1374 = vcmp.eq.s32.totalorder %v209, %v1360
        %vm1375 = vcmp.eq.s32.totalorder %v210, %v1360
        %vm1376 = vcmp.eq.s32.totalorder %v211, %v1360
        %vm1377 = vmor %vm1343, %vm1361
        %vm1378 = vmor %vm1344, %vm1362
        %vm1379 = vmor %vm1345, %vm1363
        %vm1380 = vmor %vm1346, %vm1364
        %vm1381 = vmor %vm1347, %vm1365
        %vm1382 = vmor %vm1348, %vm1366
        %vm1383 = vmor %vm1349, %vm1367
        %vm1384 = vmor %vm1350, %vm1368
        %vm1385 = vmor %vm1351, %vm1369
        %vm1386 = vmor %vm1352, %vm1370
        %vm1387 = vmor %vm1353, %vm1371
        %vm1388 = vmor %vm1354, %vm1372
        %vm1389 = vmor %vm1355, %vm1373
        %vm1390 = vmor %vm1356, %vm1374
        %vm1391 = vmor %vm1357, %vm1375
        %vm1392 = vmor %vm1358, %vm1376
        %v1393 = vadd.s32 %v190, 52
        %v1394 = vperm.slane %v1393, 0
        %vm1395 = vcmp.eq.s32.totalorder %v196, %v1394
        %vm1396 = vcmp.eq.s32.totalorder %v197, %v1394
        %vm1397 = vcmp.eq.s32.totalorder %v198, %v1394
        %vm1398 = vcmp.eq.s32.totalorder %v199, %v1394
        %vm1399 = vcmp.eq.s32.totalorder %v200, %v1394
        %vm1400 = vcmp.eq.s32.totalorder %v201, %v1394
        %vm1401 = vcmp.eq.s32.totalorder %v202, %v1394
        %vm1402 = vcmp.eq.s32.totalorder %v203, %v1394
        %vm1403 = vcmp.eq.s32.totalorder %v204, %v1394
        %vm1404 = vcmp.eq.s32.totalorder %v205, %v1394
        %vm1405 = vcmp.eq.s32.totalorder %v206, %v1394
        %vm1406 = vcmp.eq.s32.totalorder %v207, %v1394
        %vm1407 = vcmp.eq.s32.totalorder %v208, %v1394
        %vm1408 = vcmp.eq.s32.totalorder %v209, %v1394
        %vm1409 = vcmp.eq.s32.totalorder %v210, %v1394
        %vm1410 = vcmp.eq.s32.totalorder %v211, %v1394
        %vm1411 = vmor %vm1377, %vm1395
        %vm1412 = vmor %vm1378, %vm1396
        %vm1413 = vmor %vm1379, %vm1397
        %vm1414 = vmor %vm1380, %vm1398
        %vm1415 = vmor %vm1381, %vm1399
        %vm1416 = vmor %vm1382, %vm1400
        %vm1417 = vmor %vm1383, %vm1401
        %vm1418 = vmor %vm1384, %vm1402
        %vm1419 = vmor %vm1385, %vm1403
        %vm1420 = vmor %vm1386, %vm1404
        %vm1421 = vmor %vm1387, %vm1405
        %vm1422 = vmor %vm1388, %vm1406
        %vm1423 = vmor %vm1389, %vm1407
        %vm1424 = vmor %vm1390, %vm1408
        %vm1425 = vmor %vm1391, %vm1409
        %vm1426 = vmor %vm1392, %vm1410
        %v1427 = vsel %vm1411, 1, 0
        %v1428 = vsel %vm1412, 1, 0
        %v1429 = vsel %vm1413, 1, 0
        %v1430 = vsel %vm1414, 1, 0
        %v1431 = vsel %vm1415, 1, 0
        %v1432 = vsel %vm1416, 1, 0
        %v1433 = vsel %vm1417, 1, 0
        %v1434 = vsel %vm1418, 1, 0
        %v1435 = vsel %vm1419, 1, 0
        %v1436 = vsel %vm1420, 1, 0
        %v1437 = vsel %vm1421, 1, 0
        %v1438 = vsel %vm1422, 1, 0
        %v1439 = vsel %vm1423, 1, 0
        %v1440 = vsel %vm1424, 1, 0
        %v1441 = vsel %vm1425, 1, 0
        %v1442 = vsel %vm1426, 1, 0
        %v1443 = vcvt.s32.f32 %v1427
        %v1444 = vcvt.s32.f32 %v1428
        %v1445 = vcvt.s32.f32 %v1429
        %v1446 = vcvt.s32.f32 %v1430
        %v1447 = vcvt.s32.f32 %v1431
        %v1448 = vcvt.s32.f32 %v1432
        %v1449 = vcvt.s32.f32 %v1433
        %v1450 = vcvt.s32.f32 %v1434
        %v1451 = vcvt.s32.f32 %v1435
        %v1452 = vcvt.s32.f32 %v1436
        %v1453 = vcvt.s32.f32 %v1437
        %v1454 = vcvt.s32.f32 %v1438
        %v1455 = vcvt.s32.f32 %v1439
        %v1456 = vcvt.s32.f32 %v1440
        %v1457 = vcvt.s32.f32 %v1441
        %v1458 = vcvt.s32.f32 %v1442
        %1459 = vmatpush.msra.mxu0 %v1458
        %1460 = vmatpush.msra.mxu0 %v1457
        %1461 = vmatpush.msra.mxu0 %v1456
        %1462 = vmatpush.msra.mxu0 %v1455
        %1463 = vmatpush.msra.mxu0 %v1454
        %1464 = vmatpush.msra.mxu0 %v1453
        %1465 = vmatpush.msra.mxu0 %v1452
        %1466 = vmatpush.msra.mxu0 %v1451
        %1467 = vmatpush.msra.mxu0 %v1450
        %1468 = vmatpush.msra.mxu0 %v1449
        %1469 = vmatpush.msra.mxu0 %v1448
        %1470 = vmatpush.msra.mxu0 %v1447
        %1471 = vmatpush.msra.mxu0 %v1446
        %1472 = vmatpush.msra.mxu0 %v1445
        %1473 = vmatpush.msra.mxu0 %v1444
        %1474 = vmatpush.msra.mxu0 %v1443
        %1475 = vmatmul.f32.gmra.mxu0 %v191
        %v1476 = vpop.f32.mrf.mxu0
        %v1477 = vadd.f32 0.0, %v1476
        %1478 = vmatmul.f32.gmra.mxu0 %v192
        %v1479 = vpop.f32.mrf.mxu0
        %v1480 = vadd.f32 0.0, %v1479
        %1481 = vmatmul.f32.gmra.mxu0 %v193
        %v1482 = vpop.f32.mrf.mxu0
        %v1483 = vadd.f32 0.0, %v1482
        %1484 = vmatmul.f32.gmra.mxu0 %v194
        %v1485 = vpop.f32.mrf.mxu0
        %v1486 = vadd.f32 0.0, %v1485
        %1487 = vdwg.mxu0
        %1488 = vst [vmem:[%s180 + $0x18] sm:$0xff] %v1477
        %1489 = vst [vmem:[%s180 + $0x38] sm:$0xff] %v1480
        %1490 = vst [vmem:[%s180 + $0x58] sm:$0xff] %v1483
        %1491 = vst [vmem:[%s180 + $0x78] sm:$0xff] %v1486
        %s1492 = sand.u32 %s75, 1
        %s1493 = scalar_lea.sflag [#allocation4], %s1492
        %s1494 = sand.u32 %s75, 1
        %s1495 = smul.addr %s1494, 128
        %s1496 = scalar_lea.vmem [#allocation7], %s1495
        // Predicated region
        $region37: #{tpu_custom_call.1} parent=27 // pred_check
          %p1497 = pneg %p85
        $region38: #{tpu_custom_call.1} parent=27 // pred_check_branch
          %1499 = sbr.rel (%p1497) target = $region40
        $region39: #{tpu_custom_call.1} parent=27 // pred_region
          %s1500 = smul.u32 4, %s20
          %1502 = vsyncadd %s1493, 0
          %s1503 = smul.addr %s1500, 8
          %s1504 = scalar_lea.hbm %s2, %s1503
          %s1505 = sshll.u32 %s1496, 4
          %s1506 = int_to_ptr.vmem [resolvable:$true] %s1505
          %s1507 = sshll.u32 %s1504, 4
          %s1508 = int_to_ptr.hbm [resolvable:$true] %s1507
          %1513 = dma.vmem_to_hbm [thread:$0]  %s1506, 2048, %s1508, %s1493, 512, 1024, 32
        $region40: #{tpu_custom_call.1} parent=27 // pred_fallthru
          _
      $region28: #{tpu_custom_call.1} parent=5 // pred_fallthru
        _
      %p1514 = scmp.le.s32.totalorder 2, %s15
      // Predicated region
      $region41: #{tpu_custom_call.1} parent=5 // pred_check
        %p1515 = pneg %p1514
      $region42: #{tpu_custom_call.1} parent=5 // pred_check_branch
        %1517 = sbr.rel (%p1515) target = $region44
      $region43: #{tpu_custom_call.1} parent=5 // pred_region
        %s1518 = ssub.s32 %s15, 2
        // Predicated region
        $region45: #{tpu_custom_call.1} parent=43 // pred_check
          %p1519 = pneg %p91
        $region46: #{tpu_custom_call.1} parent=43 // pred_check_branch
          %1521 = sbr.rel (%p1519) target = $region48
        $region47: #{tpu_custom_call.1} parent=43 // pred_region
          %s1522 = sand.u32 %s76, 1
          %s1523 = scalar_lea.sflag [#allocation4], %s1522
          %s1524 = sand.u32 %s76, 1
          %s1525 = smul.addr %s1524, 128
          %s1526 = scalar_lea.vmem [#allocation7], %s1525
          %1528 = dma.done %s1523, 2048
        $region48: #{tpu_custom_call.1} parent=43 // pred_fallthru
          _
      $region44: #{tpu_custom_call.1} parent=5 // pred_fallthru
        _
    $region6: #{tpu_custom_call.1} parent=1 // loop_footer
      %s19 = sadd.s32 1, %s15
    $region7: #{tpu_custom_call.1} parent=1 // loop_footer_branch
      %14 = sbr.rel target = $region3
    $region8: #{tpu_custom_call.1} parent=1 // loop_exit
      _
    %1529 = vsyncpa [#allocation3], 1
    %s1530 = scalar_lea.sflag [#allocation3], 1
    %1531 = vsyncpa %s1530, 1
    %1532 = vsyncpa [#allocation6], 1
    %1533 = vsyncpa [#allocation4], 1
    %s1534 = scalar_lea.sflag [#allocation4], 1
    %1535 = vsyncpa %s1534, 1

</llo_original>
